<compile_context>
chip_gen: v7x
topology: tpu7x:2x2x1
jax: 0.10.0
libtpu: 0.0.40
codegen_flags: <defaults>
</compile_context>

<pallas_src>
import functools
import math

import numpy as np
import jax
import jax.numpy as jnp
from jax.experimental import pallas as pl
from jax.experimental.pallas import tpu as pltpu


def _round_up(a, b):
    return ((a + b - 1) // b) * b


def _resolve_tiles(n, tile_n, tile_k):
    """Clamp tile sizes to the (128-padded) graph size, keeping >=2 destination
    tiles when possible so the parallel grid axis can shard across TensorCores."""
    n128 = _round_up(n, 128)
    if n128 >= 256:
        max_tile_n = max(128, (n128 // 2) // 128 * 128)
    else:
        max_tile_n = n128
    tile_n = max(128, min(tile_n, max_tile_n) // 128 * 128)
    tile_k = max(128, min(tile_k, n128) // 128 * 128)
    n_pad = _round_up(n, math.lcm(tile_n, tile_k))
    return tile_n, tile_k, n_pad


def prepare_graph(adj, *, tile_n=1024, tile_k=1024, adj_dtype=jnp.int8):
    """One-time conversion of a dense (N, N) adjacency (adj[dst, src] = #edges
    src->dst) into the kernel's streaming format. Do this once per graph and
    reuse across forward calls (hoists the O(N^2) pad/cast out of the hot path).

    Returns a dict with:
      adj     : (n_pad, n_pad) adjacency narrowed to adj_dtype (default int8,
                exact for integer edge multiplicities <= 127)
      kidx    : flattened (num_i * max_cnt,) int32 block-CSR column indices
                (padded entries repeat the last valid index -> DMA reuse)
      cnt     : (num_i,) int32 number of non-empty source blocks per dest tile
      max_cnt : python int, inner grid extent
      tile_n, tile_k : resolved tile sizes
    """
    n = adj.shape[0]
    tile_n, tile_k, n_pad = _resolve_tiles(n, tile_n, tile_k)
    num_i, num_k = n_pad // tile_n, n_pad // tile_k

    adj_p = jnp.zeros((n_pad, n_pad), adj_dtype).at[:n, :n].set(
        adj.astype(adj_dtype))

    # Small (num_i, num_k) non-emptiness map computed on device, pulled to host
    # once to build the block-CSR metadata.
    nonempty = np.asarray(
        jnp.any(adj_p.reshape(num_i, tile_n, num_k, tile_k) != 0, axis=(1, 3)))
    counts = nonempty.sum(axis=1).astype(np.int32)
    max_cnt = max(int(counts.max()), 1)
    kidx = np.zeros((num_i, max_cnt), np.int32)
    for i in range(num_i):
        ks = np.nonzero(nonempty[i])[0].astype(np.int32)
        if ks.size:
            kidx[i, :ks.size] = ks
            kidx[i, ks.size:] = ks[-1]   # repeated index -> pipeline skips re-DMA
    return dict(adj=adj_p,
                kidx=jnp.asarray(kidx.reshape(-1)),
                cnt=jnp.asarray(counts),
                max_cnt=max_cnt,
                tile_n=tile_n,
                tile_k=tile_k)


def _sum_gnn_kernel(kidx_ref, cnt_ref, adj_ref, xs_ref, xd_ref, w1a_ref,
                    w1b_ref, b1_ref, w2_ref, b2_ref, out_ref, msg_acc):
    # kidx_ref : (num_i * max_cnt,) SMEM  block-CSR k indices (scalar prefetch)
    # cnt_ref  : (num_i,)          SMEM  non-empty block counts per dest tile
    # adj_ref  : (tile_n, tile_k)  int8 adjacency block A[dst-tile, src-tile]
    # xs_ref   : (tile_k, dp)      bf16 source-node features for this k block
    # xd_ref   : (tile_n, dp)      f32 destination-node features for this i tile
    # w1a_ref  : (dp, hp)          first-linear weights acting on x
    # w1b_ref  : (dp, hp)          first-linear weights acting on the message
    # b1_ref   : (1, hp)
    # w2_ref   : (hp, dp)
    # b2_ref   : (1, dp)
    # out_ref  : (tile_n, dp)
    # msg_acc  : (tile_n, dp) f32  VMEM accumulator for A @ x
    i = pl.program_id(0)
    k = pl.program_id(1)

    @pl.when(k == 0)
    def _():
        msg_acc[...] = jnp.zeros_like(msg_acc)

    # Partial aggregation (copy_u_sum): only for real (non-padded) blocks.
    # bf16 x bf16 MXU matmul with f32 accumulation.
    @pl.when(k < cnt_ref[i])
    def _():
        a = adj_ref[...].astype(jnp.bfloat16)
        msg_acc[...] += jnp.dot(a, xs_ref[...],
                                preferred_element_type=jnp.float32)

    # MLP epilogue on the last source step (tiny vs. the aggregation; f32).
    @pl.when(k == pl.num_programs(1) - 1)
    def _():
        x_tile = xd_ref[...]
        # concat([x, msg]) @ W1 == x @ W1a + msg @ W1b
        h = (jnp.dot(x_tile, w1a_ref[...], preferred_element_type=jnp.float32)
             + jnp.dot(msg_acc[...], w1b_ref[...],
                       preferred_element_type=jnp.float32)
             + b1_ref[...])
        # dropout_1: identity (eval mode)
        # exact GELU (PyTorch nn.GELU default, erf-based)
        h = 0.5 * h * (1.0 + jax.lax.erf(h * 0.7071067811865475))
        y = jnp.dot(h, w2_ref[...], preferred_element_type=jnp.float32) + b2_ref[...]
        # dropout_2: identity (eval mode)
        out_ref[...] = y.astype(out_ref.dtype)


@functools.partial(jax.jit, static_argnames=("tile_n", "tile_k", "max_cnt"))
def _sum_gnn_forward(kidx, cnt, adj_p, x, w1, b1, w2, b2, *, tile_n, tile_k,
                     max_cnt):
    n, dim = x.shape
    n_pad = adj_p.shape[0]
    hidden = w1.shape[0]
    f32 = jnp.float32

    # Lane-dense padding of the feature / hidden dims (multiples of 128).
    dp = _round_up(dim, 128)
    hp = _round_up(hidden, 128)

    # Source features: bf16 (re-streamed once per destination tile -> narrow).
    xs = jnp.zeros((n_pad, dp), jnp.bfloat16).at[:n, :dim].set(
        x.astype(jnp.bfloat16))
    # Destination features: f32 (read once per tile; exact x passthrough).
    xd = jnp.zeros((n_pad, dp), f32).at[:n, :dim].set(x.astype(f32))

    # Pre-transpose W1 to (in, out), split into the x / message halves, zero-pad.
    w1t = jnp.transpose(w1).astype(f32)                       # (2*dim, hidden)
    w1a = jnp.zeros((dp, hp), f32).at[:dim, :hidden].set(w1t[:dim, :])
    w1b = jnp.zeros((dp, hp), f32).at[:dim, :hidden].set(w1t[dim:, :])
    b1p = jnp.zeros((1, hp), f32).at[0, :hidden].set(b1.astype(f32))
    w2p = jnp.zeros((hp, dp), f32).at[:hidden, :dim].set(
        jnp.transpose(w2).astype(f32))
    b2p = jnp.zeros((1, dp), f32).at[0, :dim].set(b2.astype(f32))

    num_i = n_pad // tile_n
    grid = (num_i, max_cnt)

    # Explicit VMEM budget (double-buffered inputs/outputs + weights + scratch),
    # capped at 48 MiB (headroom under v7x's 64 MiB physical VMEM).
    adj_bytes = adj_p.dtype.itemsize
    vmem_est = (2 * tile_n * tile_k * adj_bytes          # adj double buffer
                + 2 * tile_k * dp * 2                    # xs (bf16)
                + 2 * tile_n * dp * 4                    # xd (f32)
                + 2 * tile_n * dp * x.dtype.itemsize     # out
                + 2 * (2 * dp * hp + hp + hp * dp + dp) * 4  # weights
                + tile_n * dp * 4)                       # msg_acc scratch
    vmem_limit = min(48 * 1024 * 1024,
                     max(16 * 1024 * 1024, int(vmem_est * 2)))

    # Block-CSR driven index maps (scalar-prefetch refs arrive positionally).
    def adj_map(i, k, kidx_ref, cnt_ref):
        return (i, kidx_ref[i * max_cnt + k])

    def xs_map(i, k, kidx_ref, cnt_ref):
        return (kidx_ref[i * max_cnt + k], 0)

    def dst_map(i, k, kidx_ref, cnt_ref):
        return (i, 0)

    def const_map(i, k, kidx_ref, cnt_ref):
        return (0, 0)

    out = pl.pallas_call(
        _sum_gnn_kernel,
        out_shape=jax.ShapeDtypeStruct((n_pad, dp), x.dtype),
        grid_spec=pltpu.PrefetchScalarGridSpec(
            num_scalar_prefetch=2,
            grid=grid,
            in_specs=[
                pl.BlockSpec((tile_n, tile_k), adj_map),   # adjacency block
                pl.BlockSpec((tile_k, dp), xs_map),        # x (source rows, bf16)
                pl.BlockSpec((tile_n, dp), dst_map),       # x (dest rows, f32)
                pl.BlockSpec((dp, hp), const_map),         # w1a
                pl.BlockSpec((dp, hp), const_map),         # w1b
                pl.BlockSpec((1, hp), const_map),          # b1
                pl.BlockSpec((hp, dp), const_map),         # w2
                pl.BlockSpec((1, dp), const_map),          # b2
            ],
            out_specs=pl.BlockSpec((tile_n, dp), dst_map),
            scratch_shapes=[pltpu.VMEM((tile_n, dp), jnp.float32)],
        ),
        compiler_params=pltpu.CompilerParams(
            dimension_semantics=("parallel", "arbitrary"),
            vmem_limit_bytes=vmem_limit),
    )(kidx, cnt, adj_p, xs, xd, w1a, w1b, b1p, w2p, b2p)

    return out[:n, :dim]


def sum_gnn_forward(graph, x, w1, b1, w2, b2):
    """graph: output of prepare_graph(adj, ...).  x: (N, dim).
    w1: (hidden, 2*dim), b1: (hidden,), w2: (dim, hidden), b2: (dim,)
    (PyTorch nn.Linear layout)."""
    return _sum_gnn_forward(graph["kidx"], graph["cnt"], graph["adj"],
                            x, w1, b1, w2, b2,
                            tile_n=graph["tile_n"], tile_k=graph["tile_k"],
                            max_cnt=graph["max_cnt"])


def _reference(adj, x, w1, b1, w2, b2):
    msg = adj.astype(jnp.float32) @ x.astype(jnp.float32)
    h = jnp.concatenate([x.astype(jnp.float32), msg], axis=1)
    h = h @ w1.T + b1
    h = 0.5 * h * (1.0 + jax.lax.erf(h * 0.7071067811865475))
    y = h @ w2.T + b2
    return y.astype(x.dtype)


if __name__ == "__main__":
    # Small, module-consistent shapes (>=2 destination tiles, >=2 source tiles).
    N = 512                      # number of graph nodes
    dim = 64                     # feature dim
    hidden_dim_multiplier = 2
    hidden = dim * hidden_dim_multiplier    # 128
    in_dim = 2 * dim                        # input_dim_multiplier = 2 (concat)

    key = jax.random.PRNGKey(0)
    k_x, k_e, k_w1, k_b1, k_w2, k_b2 = jax.random.split(key, 6)

    # Node features.
    x = jax.random.normal(k_x, (N, dim), dtype=jnp.float32)

    # Deterministic synthetic graph: random sparse adjacency, A[dst, src] in {0,1}.
    adj = (jax.random.uniform(k_e, (N, N)) < 0.05).astype(jnp.float32)

    # Deterministic parameter init (nn.Linear-style uniform fan-in bounds).
    bound1 = 1.0 / math.sqrt(in_dim)
    bound2 = 1.0 / math.sqrt(hidden)
    w1 = jax.random.uniform(k_w1, (hidden, in_dim), minval=-bound1, maxval=bound1)
    b1 = jax.random.uniform(k_b1, (hidden,), minval=-bound1, maxval=bound1)
    w2 = jax.random.uniform(k_w2, (dim, hidden), minval=-bound2, maxval=bound2)
    b2 = jax.random.uniform(k_b2, (dim,), minval=-bound2, maxval=bound2)

    def check(adj_case, tile_n, tile_k):
        graph = prepare_graph(adj_case, tile_n=tile_n, tile_k=tile_k)
        out = jax.block_until_ready(sum_gnn_forward(graph, x, w1, b1, w2, b2))
        ref = _reference(adj_case, x, w1, b1, w2, b2)
        assert out.shape == (N, dim)
        # bf16 source features in the aggregation give ~2^-9 relative rounding
        # on the message; tolerance vs the pure-f32 reference reflects this.
        assert jnp.allclose(out, ref, atol=2e-2, rtol=2e-2), "mismatch vs reference"

    # Case 1: random graph -> every adjacency block non-empty (dense k-scan,
    # grid (2, 4) with tile_n=256 / tile_k=128).
    check(adj, tile_n=256, tile_k=128)

    # Case 2: structured-sparse graph -> destination tile 1 only receives from
    # source block 0, exercising block-CSR skipping (uneven counts, padded
    # k-steps with deduplicated indices and guarded accumulation).
    mask = jnp.ones((N, N), jnp.float32).at[256:, 128:].set(0.0)
    check(adj * mask, tile_n=256, tile_k=128)

    print("KERNEL_OK")
</pallas_src>

<mosaic_0001>
module attributes {stable_mosaic.version = 11 : i64} {
  func.func @_sum_gnn_kernel(%arg0: i32, %arg1: i32, %arg2: memref<8xi32, #tpu.memory_space<smem>>, %arg3: memref<2xi32, #tpu.memory_space<smem>>, %arg4: memref<256x128xi8, #tpu.memory_space<vmem>>, %arg5: memref<128x128xbf16, #tpu.memory_space<vmem>>, %arg6: memref<256x128xf32, #tpu.memory_space<vmem>>, %arg7: memref<128x128xf32, #tpu.memory_space<vmem>>, %arg8: memref<128x128xf32, #tpu.memory_space<vmem>>, %arg9: memref<1x128xf32, #tpu.memory_space<vmem>>, %arg10: memref<128x128xf32, #tpu.memory_space<vmem>>, %arg11: memref<1x128xf32, #tpu.memory_space<vmem>>, %arg12: memref<256x128xf32, #tpu.memory_space<vmem>>, %arg13: memref<256x128xf32, #tpu.memory_space<vmem>>) attributes {dimension_semantics = [#tpu.dimension_semantics<parallel>, #tpu.dimension_semantics<arbitrary>], iteration_bounds = array<i64: 2, 4>, scalar_prefetch = 2 : i64, scratch_operands = 1 : i64, tpu.core_type = #tpu.core_type<tc>, window_params = [{transform_indices = @transform_0, window_bounds = array<i64: 256, 128>}, {transform_indices = @transform_1, window_bounds = array<i64: 128, 128>}, {transform_indices = @transform_2, window_bounds = array<i64: 256, 128>}, {pipeline_mode = #tpu.pipeline_mode<synchronous>, transform_indices = @transform_3, window_bounds = array<i64: 128, 128>}, {pipeline_mode = #tpu.pipeline_mode<synchronous>, transform_indices = @transform_4, window_bounds = array<i64: 128, 128>}, {pipeline_mode = #tpu.pipeline_mode<synchronous>, transform_indices = @transform_5, window_bounds = array<i64: 1, 128>}, {pipeline_mode = #tpu.pipeline_mode<synchronous>, transform_indices = @transform_6, window_bounds = array<i64: 128, 128>}, {pipeline_mode = #tpu.pipeline_mode<synchronous>, transform_indices = @transform_7, window_bounds = array<i64: 1, 128>}, {transform_indices = @transform_8, window_bounds = array<i64: 256, 128>}]} {
    %c0_i32 = arith.constant 0 : i32
    %0 = arith.cmpi eq, %arg1, %c0_i32 : i32
    %1 = arith.extui %0 : i1 to i32
    %c0_i32_0 = arith.constant 0 : i32
    %2 = arith.cmpi ne, %1, %c0_i32_0 : i32
    scf.if %2 {
      %cst = arith.constant 0.000000e+00 : f32
      %11 = vector.broadcast %cst : f32 to vector<256x128xf32>
      %c0 = arith.constant 0 : index
      %c0_3 = arith.constant 0 : index
      %12 = vector.load %arg13[%c0, %c0_3] : memref<256x128xf32, #tpu.memory_space<vmem>>, vector<256x128xf32>
      tpu.vector_store %arg13[%c0, %c0_3], %11 {strides = array<i32>} : memref<256x128xf32, #tpu.memory_space<vmem>>, vector<256x128xf32>,
    } else {
    }
    %3 = arith.index_cast %arg0 : i32 to index
    %4 = memref.load %arg3[%3] : memref<2xi32, #tpu.memory_space<smem>>
    %5 = arith.cmpi slt, %arg1, %4 : i32
    %6 = arith.extui %5 : i1 to i32
    %c0_i32_1 = arith.constant 0 : i32
    %7 = arith.cmpi ne, %6, %c0_i32_1 : i32
    scf.if %7 {
      %c0 = arith.constant 0 : index
      %c0_3 = arith.constant 0 : index
      %11 = vector.load %arg4[%c0, %c0_3] : memref<256x128xi8, #tpu.memory_space<vmem>>, vector<256x128xi8>
      %12 = arith.sitofp %11 : vector<256x128xi8> to vector<256x128xbf16>
      %c0_4 = arith.constant 0 : index
      %c0_5 = arith.constant 0 : index
      %13 = vector.load %arg13[%c0_4, %c0_5] : memref<256x128xf32, #tpu.memory_space<vmem>>, vector<256x128xf32>
      %c0_6 = arith.constant 0 : index
      %c0_7 = arith.constant 0 : index
      %14 = vector.load %arg5[%c0_6, %c0_7] : memref<128x128xbf16, #tpu.memory_space<vmem>>, vector<128x128xbf16>
      %cst = arith.constant dense<0.000000e+00> : vector<256x128xf32>
      %15 = tpu.matmul %12, %14, %cst {dimension_numbers = #tpu.dot_dimension_numbers<[1], [0], [0], [1], [0, 0, 1, 1], [], []>} : vector<256x128xbf16>, vector<128x128xbf16>, vector<256x128xf32> -> vector<256x128xf32>
      %16 = arith.addf %13, %15 : vector<256x128xf32>
      %c0_8 = arith.constant 0 : index
      %c0_9 = arith.constant 0 : index
      %17 = vector.load %arg13[%c0_8, %c0_9] : memref<256x128xf32, #tpu.memory_space<vmem>>, vector<256x128xf32>
      tpu.vector_store %arg13[%c0_8, %c0_9], %16 {strides = array<i32>} : memref<256x128xf32, #tpu.memory_space<vmem>>, vector<256x128xf32>,
    } else {
    }
    %c3_i32 = arith.constant 3 : i32
    %8 = arith.cmpi eq, %arg1, %c3_i32 : i32
    %9 = arith.extui %8 : i1 to i32
    %c0_i32_2 = arith.constant 0 : i32
    %10 = arith.cmpi ne, %9, %c0_i32_2 : i32
    scf.if %10 {
      %c0 = arith.constant 0 : index
      %c0_3 = arith.constant 0 : index
      %11 = vector.load %arg6[%c0, %c0_3] : memref<256x128xf32, #tpu.memory_space<vmem>>, vector<256x128xf32>
      %c0_4 = arith.constant 0 : index
      %c0_5 = arith.constant 0 : index
      %12 = vector.load %arg7[%c0_4, %c0_5] : memref<128x128xf32, #tpu.memory_space<vmem>>, vector<128x128xf32>
      %cst = arith.constant dense<0.000000e+00> : vector<256x128xf32>
      %13 = tpu.matmul %11, %12, %cst {dimension_numbers = #tpu.dot_dimension_numbers<[1], [0], [0], [1], [0, 0, 1, 1], [], []>} : vector<256x128xf32>, vector<128x128xf32>, vector<256x128xf32> -> vector<256x128xf32>
      %c0_6 = arith.constant 0 : index
      %c0_7 = arith.constant 0 : index
      %14 = vector.load %arg13[%c0_6, %c0_7] : memref<256x128xf32, #tpu.memory_space<vmem>>, vector<256x128xf32>
      %c0_8 = arith.constant 0 : index
      %c0_9 = arith.constant 0 : index
      %15 = vector.load %arg8[%c0_8, %c0_9] : memref<128x128xf32, #tpu.memory_space<vmem>>, vector<128x128xf32>
      %cst_10 = arith.constant dense<0.000000e+00> : vector<256x128xf32>
      %16 = tpu.matmul %14, %15, %cst_10 {dimension_numbers = #tpu.dot_dimension_numbers<[1], [0], [0], [1], [0, 0, 1, 1], [], []>} : vector<256x128xf32>, vector<128x128xf32>, vector<256x128xf32> -> vector<256x128xf32>
      %17 = arith.addf %13, %16 : vector<256x128xf32>
      %c0_11 = arith.constant 0 : index
      %c0_12 = arith.constant 0 : index
      %18 = vector.load %arg9[%c0_11, %c0_12] : memref<1x128xf32, #tpu.memory_space<vmem>>, vector<1x128xf32>
      %19 = vector.broadcast %18 : vector<1x128xf32> to vector<256x128xf32>
      %20 = arith.addf %17, %19 : vector<256x128xf32>
      %cst_13 = arith.constant 5.000000e-01 : f32
      %21 = vector.broadcast %cst_13 : f32 to vector<256x128xf32>
      %22 = arith.mulf %21, %20 : vector<256x128xf32>
      %cst_14 = arith.constant 0.707106769 : f32
      %23 = vector.broadcast %cst_14 : f32 to vector<256x128xf32>
      %24 = arith.mulf %20, %23 : vector<256x128xf32>
      %25 = math.erf %24 : vector<256x128xf32>
      %cst_15 = arith.constant 1.000000e+00 : f32
      %26 = vector.broadcast %cst_15 : f32 to vector<256x128xf32>
      %27 = arith.addf %26, %25 : vector<256x128xf32>
      %28 = arith.mulf %22, %27 : vector<256x128xf32>
      %c0_16 = arith.constant 0 : index
      %c0_17 = arith.constant 0 : index
      %29 = vector.load %arg10[%c0_16, %c0_17] : memref<128x128xf32, #tpu.memory_space<vmem>>, vector<128x128xf32>
      %cst_18 = arith.constant dense<0.000000e+00> : vector<256x128xf32>
      %30 = tpu.matmul %28, %29, %cst_18 {dimension_numbers = #tpu.dot_dimension_numbers<[1], [0], [0], [1], [0, 0, 1, 1], [], []>} : vector<256x128xf32>, vector<128x128xf32>, vector<256x128xf32> -> vector<256x128xf32>
      %c0_19 = arith.constant 0 : index
      %c0_20 = arith.constant 0 : index
      %31 = vector.load %arg11[%c0_19, %c0_20] : memref<1x128xf32, #tpu.memory_space<vmem>>, vector<1x128xf32>
      %32 = vector.broadcast %31 : vector<1x128xf32> to vector<256x128xf32>
      %33 = arith.addf %30, %32 : vector<256x128xf32>
      %c0_21 = arith.constant 0 : index
      %c0_22 = arith.constant 0 : index
      %34 = vector.load %arg12[%c0_21, %c0_22] : memref<256x128xf32, #tpu.memory_space<vmem>>, vector<256x128xf32>
      tpu.vector_store %arg12[%c0_21, %c0_22], %33 {strides = array<i32>} : memref<256x128xf32, #tpu.memory_space<vmem>>, vector<256x128xf32>,
    } else {
    }
    return
  }
  func.func @transform_0(%arg0: i32, %arg1: i32, %arg2: memref<8xi32, #tpu.memory_space<smem>>, %arg3: memref<2xi32, #tpu.memory_space<smem>>) -> (i32, i32) {
    %c4_i32 = arith.constant 4 : i32
    %0 = arith.muli %arg0, %c4_i32 : i32
    %1 = arith.addi %0, %arg1 : i32
    %2 = arith.index_cast %1 : i32 to index
    %3 = memref.load %arg2[%2] : memref<8xi32, #tpu.memory_space<smem>>
    %c0_i32 = arith.constant 0 : i32
    return %arg0, %3 : i32, i32
  }
  func.func @transform_1(%arg0: i32, %arg1: i32, %arg2: memref<8xi32, #tpu.memory_space<smem>>, %arg3: memref<2xi32, #tpu.memory_space<smem>>) -> (i32, i32) {
    %c4_i32 = arith.constant 4 : i32
    %0 = arith.muli %arg0, %c4_i32 : i32
    %1 = arith.addi %0, %arg1 : i32
    %2 = arith.index_cast %1 : i32 to index
    %3 = memref.load %arg2[%2] : memref<8xi32, #tpu.memory_space<smem>>
    %c0_i32 = arith.constant 0 : i32
    %c0_i32_0 = arith.constant 0 : i32
    return %3, %c0_i32 : i32, i32
  }
  func.func @transform_2(%arg0: i32, %arg1: i32, %arg2: memref<8xi32, #tpu.memory_space<smem>>, %arg3: memref<2xi32, #tpu.memory_space<smem>>) -> (i32, i32) {
    %c0_i32 = arith.constant 0 : i32
    %c0_i32_0 = arith.constant 0 : i32
    return %arg0, %c0_i32 : i32, i32
  }
  func.func @transform_3(%arg0: i32, %arg1: i32, %arg2: memref<8xi32, #tpu.memory_space<smem>>, %arg3: memref<2xi32, #tpu.memory_space<smem>>) -> (i32, i32) {
    %c0_i32 = arith.constant 0 : i32
    %c0_i32_0 = arith.constant 0 : i32
    %c0_i32_1 = arith.constant 0 : i32
    return %c0_i32, %c0_i32_0 : i32, i32
  }
  func.func @transform_4(%arg0: i32, %arg1: i32, %arg2: memref<8xi32, #tpu.memory_space<smem>>, %arg3: memref<2xi32, #tpu.memory_space<smem>>) -> (i32, i32) {
    %c0_i32 = arith.constant 0 : i32
    %c0_i32_0 = arith.constant 0 : i32
    %c0_i32_1 = arith.constant 0 : i32
    return %c0_i32, %c0_i32_0 : i32, i32
  }
  func.func @transform_5(%arg0: i32, %arg1: i32, %arg2: memref<8xi32, #tpu.memory_space<smem>>, %arg3: memref<2xi32, #tpu.memory_space<smem>>) -> (i32, i32) {
    %c0_i32 = arith.constant 0 : i32
    %c0_i32_0 = arith.constant 0 : i32
    %c0_i32_1 = arith.constant 0 : i32
    return %c0_i32, %c0_i32_0 : i32, i32
  }
  func.func @transform_6(%arg0: i32, %arg1: i32, %arg2: memref<8xi32, #tpu.memory_space<smem>>, %arg3: memref<2xi32, #tpu.memory_space<smem>>) -> (i32, i32) {
    %c0_i32 = arith.constant 0 : i32
    %c0_i32_0 = arith.constant 0 : i32
    %c0_i32_1 = arith.constant 0 : i32
    return %c0_i32, %c0_i32_0 : i32, i32
  }
  func.func @transform_7(%arg0: i32, %arg1: i32, %arg2: memref<8xi32, #tpu.memory_space<smem>>, %arg3: memref<2xi32, #tpu.memory_space<smem>>) -> (i32, i32) {
    %c0_i32 = arith.constant 0 : i32
    %c0_i32_0 = arith.constant 0 : i32
    %c0_i32_1 = arith.constant 0 : i32
    return %c0_i32, %c0_i32_0 : i32, i32
  }
  func.func @transform_8(%arg0: i32, %arg1: i32, %arg2: memref<8xi32, #tpu.memory_space<smem>>, %arg3: memref<2xi32, #tpu.memory_space<smem>>) -> (i32, i32) {
    %c0_i32 = arith.constant 0 : i32
    %c0_i32_0 = arith.constant 0 : i32
    return %arg0, %c0_i32 : i32, i32
  }
}

</mosaic_0001>

<llo_original>
// kernel: _sum_gnn_forward.1
$region0: #{_sum_gnn_forward.1}
  #allocation0 [shape = 'u32[]', space=smem, size = 0x4, offset = 0x4, fixed_abs, tag = 'smem constant byte address 0x4 - core index']
  #allocation1 [shape = 'u32[144,128]{1,0:T(1,128)}', space=vmem, size = 0x12000, scoped, tag = 'internal scratch']
  #allocation2 [shape = 'f32[256,128]{1,0:T(8,128)}', space=vmem, size = 0x20000, scoped, tag = 'scratch operand']
  #allocation3 [shape = 's32[1]{0}', space=sflag, size = 0x4, scoped, tag = 'scoped memory for _sum_gnn_forward.1']
  #allocation4 [shape = 'u8[512]{0}', space=smem, size = 0x200, scoped, tag = 'prefetched SMEM operand 0']
  #allocation5 [shape = 'u8[512]{0}', space=smem, size = 0x200, scoped, tag = 'prefetched SMEM operand 1']
  %s0 = inlined_call_operand.vmem [shape: s32[8], index: 0, kind: input, shape index: {}]
  %s1 = inlined_call_operand.vmem [shape: s32[2], index: 1, kind: input, shape index: {}]
  %s2 = inlined_call_operand.vmem [shape: s8[512,512], index: 2, kind: input, shape index: {}]
  %s3 = inlined_call_operand.vmem [shape: bf16[512,128], index: 3, kind: input, shape index: {}]
  %s4 = inlined_call_operand.vmem [shape: f32[512,128], index: 4, kind: input, shape index: {}]
  %s5 = inlined_call_operand.vmem [shape: f32[128,128], index: 5, kind: input, shape index: {}]
  %s6 = inlined_call_operand.vmem [shape: f32[128,128], index: 6, kind: input, shape index: {}]
  %s7 = inlined_call_operand.vmem [shape: f32[1,128], index: 7, kind: input, shape index: {}]
  %s8 = inlined_call_operand.vmem [shape: f32[128,128], index: 8, kind: input, shape index: {}]
  %s9 = inlined_call_operand.vmem [shape: f32[1,128], index: 9, kind: input, shape index: {}]
  %s10 = inlined_call_operand.vmem [shape: f32[512,128], index: 10, kind: output, shape index: {}]
  %s11 = sld [smem:[#allocation0]]
  $region115: #{_sum_gnn_forward.1} parent=0
    _
  %s13 = ssub.s32 1, %s11
  %s14 = scalar_select 0, %s13, %s11
  %s15 = sshll.u32 %s0, 4
  %s16 = int_to_ptr.vmem [resolvable:$true] %s15
  %18 = dma.vmem_to_smem %s16, 16, [#allocation4], [#allocation3]
  %s19 = sshll.u32 %s1, 4
  %s20 = int_to_ptr.vmem [resolvable:$true] %s19
  %22 = dma.vmem_to_smem %s20, 16, [#allocation5], [#allocation3]
  %23 = dma.done [#allocation3], 32
  %24 = sfence
  $region1: #{_sum_gnn_forward.1} parent=0
    #allocation6 [shape = 'u8[65536]{0}', space=vmem, size = 0x10000, scoped, tag = 'input window, operand 2']
    loop: start=0, step=1, limit=10
    $region2: #{_sum_gnn_forward.1} parent=1 // loop_pre_header
      _
    $region3: #{_sum_gnn_forward.1} parent=1 // loop_header
      %s26 = sphi 0, %s30
      %p27 = scmp.ge.s32.totalorder %s26, 10
      %s33 = sphi 0, %s45
      %s34 = sphi 0, %s41
      %s35 = sphi 0, %s33
      %s36 = sphi 0, %s34
      %s37 = sphi 0, %s35
      %s38 = sphi 0, %s36
      %s56 = sphi 0, %s58
      %s59 = sphi 0, %s56
      %s60 = sphi 0, %s59
      %s76 = sphi 0, %s60
      %s88 = sphi 0, %s90
      %s91 = sphi 0, %s88
      %s92 = sphi 0, %s91
      %s108 = sphi 0, %s92
      %s114 = sphi 0, %s116
      %s117 = sphi 0, %s114
      %s118 = sphi 0, %s117
      %s134 = sphi 0, %s118
      %s138 = sphi 0, %s138
      %s140 = sphi 0, %s138
      %s141 = sphi 0, %s140
      %s155 = sphi 0, %s141
      %s159 = sphi 0, %s159
      %s161 = sphi 0, %s159
      %s162 = sphi 0, %s161
      %s176 = sphi 0, %s162
      %s180 = sphi 0, %s180
      %s182 = sphi 0, %s180
      %s183 = sphi 0, %s182
      %s197 = sphi 0, %s183
      %s201 = sphi 0, %s201
      %s203 = sphi 0, %s201
      %s204 = sphi 0, %s203
      %s218 = sphi 0, %s204
      %s222 = sphi 0, %s222
      %s224 = sphi 0, %s222
      %s225 = sphi 0, %s224
      %s239 = sphi 0, %s225
      %s245 = sphi 0, %s247
      %s248 = sphi 0, %s245
      %s249 = sphi 0, %s248
      %s265 = sphi 0, %s249
    $region4: #{_sum_gnn_forward.1} parent=1 // loop_header_branch
      %29 = sbr.rel (%p27) target = $region8
    $region5: #{_sum_gnn_forward.1} parent=1 // loop_body
      %s31 = ssub.s32 %s26, 1
      %s32 = ssub.s32 %s26, 2
      %s39 = sadd.s32 1, %s34
      %p40 = scmp.ge.s32.totalorder %s39, 4
      %s41 = scalar_select %p40, 0, %s39
      %s42 = sadd.s32 1, %s33
      %s43 = scalar_select %p40, %s42, %s33
      %p44 = scmp.ge.s32.totalorder %s43, 2
      %s45 = scalar_select %p44, 0, %s43
      %s46 = smul.u32 %s33, 4
      %s47 = sadd.s32 %s46, %s34
      %s48 = sld [smem:[#allocation4 + %s47]]
      %s49 = smul.u32 %s45, 4
      %s50 = sadd.s32 %s49, %s41
      %s51 = sld [smem:[#allocation4 + %s50]]
      %s52 = ssub.s32 %s33, %s45
      %s53 = ssub.s32 %s48, %s51
      %s54 = sor.u32 %s52, %s53
      %p55 = scmp.eq.s32.totalorder %s54, 0
      %s57 = sadd.s32 %s56, 1
      %s58 = scalar_select %p55, %s56, %s57
      %p61 = pneg %p55
      %p62 = scmp.eq.s32.totalorder %s26, 7
      %p63 = por %p61, %p62
      %p64 = scmp.ne.s32.totalorder %s56, %s59
      %p65 = scmp.eq.s32.totalorder %s26, 0
      %p66 = por %p64, %p65
      %p67 = scmp.ne.s32.totalorder %s56, %s59
      %p68 = scmp.eq.s32.totalorder %s31, 7
      %p69 = por %p67, %p68
      %p70 = scmp.ne.s32.totalorder %s59, %s60
      %p71 = scmp.eq.s32.totalorder %s31, 0
      %p72 = por %p70, %p71
      %p73 = scmp.ne.s32.totalorder %s59, %s60
      %p74 = scmp.eq.s32.totalorder %s32, 7
      %p75 = por %p73, %p74
      %p77 = scmp.ne.s32.totalorder %s60, %s76
      %p78 = scmp.eq.s32.totalorder %s32, 0
      %p79 = por %p77, %p78
      %s80 = smul.u32 %s33, 4
      %s81 = sadd.s32 %s80, %s34
      %s82 = sld [smem:[#allocation4 + %s81]]
      %s83 = smul.u32 %s45, 4
      %s84 = sadd.s32 %s83, %s41
      %s85 = sld [smem:[#allocation4 + %s84]]
      %s86 = ssub.s32 %s82, %s85
      %p87 = scmp.eq.s32.totalorder %s86, 0
      %s89 = sadd.s32 %s88, 1
      %s90 = scalar_select %p87, %s88, %s89
      %p93 = pneg %p87
      %p94 = scmp.eq.s32.totalorder %s26, 7
      %p95 = por %p93, %p94
      %p96 = scmp.ne.s32.totalorder %s88, %s91
      %p97 = scmp.eq.s32.totalorder %s26, 0
      %p98 = por %p96, %p97
      %p99 = scmp.ne.s32.totalorder %s88, %s91
      %p100 = scmp.eq.s32.totalorder %s31, 7
      %p101 = por %p99, %p100
      %p102 = scmp.ne.s32.totalorder %s91, %s92
      %p103 = scmp.eq.s32.totalorder %s31, 0
      %p104 = por %p102, %p103
      %p105 = scmp.ne.s32.totalorder %s91, %s92
      %p106 = scmp.eq.s32.totalorder %s32, 7
      %p107 = por %p105, %p106
      %p109 = scmp.ne.s32.totalorder %s92, %s108
      %p110 = scmp.eq.s32.totalorder %s32, 0
      %p111 = por %p109, %p110
      %s112 = ssub.s32 %s33, %s45
      %p113 = scmp.eq.s32.totalorder %s112, 0
      %s115 = sadd.s32 %s114, 1
      %s116 = scalar_select %p113, %s114, %s115
      %p119 = pneg %p113
      %p120 = scmp.eq.s32.totalorder %s26, 7
      %p121 = por %p119, %p120
      %p122 = scmp.ne.s32.totalorder %s114, %s117
      %p123 = scmp.eq.s32.totalorder %s26, 0
      %p124 = por %p122, %p123
      %p125 = scmp.ne.s32.totalorder %s114, %s117
      %p126 = scmp.eq.s32.totalorder %s31, 7
      %p127 = por %p125, %p126
      %p128 = scmp.ne.s32.totalorder %s117, %s118
      %p129 = scmp.eq.s32.totalorder %s31, 0
      %p130 = por %p128, %p129
      %p131 = scmp.ne.s32.totalorder %s117, %s118
      %p132 = scmp.eq.s32.totalorder %s32, 7
      %p133 = por %p131, %p132
      %p135 = scmp.ne.s32.totalorder %s118, %s134
      %p136 = scmp.eq.s32.totalorder %s32, 0
      %p137 = por %p135, %p136
      %s139 = sadd.s32 %s138, 1
      %p142 = scmp.eq.s32.totalorder %s26, 7
      %p143 = scmp.ne.s32.totalorder %s138, %s140
      %p144 = scmp.eq.s32.totalorder %s26, 0
      %p145 = por %p143, %p144
      %p146 = scmp.ne.s32.totalorder %s138, %s140
      %p147 = scmp.eq.s32.totalorder %s31, 7
      %p148 = por %p146, %p147
      %p149 = scmp.ne.s32.totalorder %s140, %s141
      %p150 = scmp.eq.s32.totalorder %s31, 0
      %p151 = por %p149, %p150
      %p152 = scmp.ne.s32.totalorder %s140, %s141
      %p153 = scmp.eq.s32.totalorder %s32, 7
      %p154 = por %p152, %p153
      %p156 = scmp.ne.s32.totalorder %s141, %s155
      %p157 = scmp.eq.s32.totalorder %s32, 0
      %p158 = por %p156, %p157
      %s160 = sadd.s32 %s159, 1
      %p163 = scmp.eq.s32.totalorder %s26, 7
      %p164 = scmp.ne.s32.totalorder %s159, %s161
      %p165 = scmp.eq.s32.totalorder %s26, 0
      %p166 = por %p164, %p165
      %p167 = scmp.ne.s32.totalorder %s159, %s161
      %p168 = scmp.eq.s32.totalorder %s31, 7
      %p169 = por %p167, %p168
      %p170 = scmp.ne.s32.totalorder %s161, %s162
      %p171 = scmp.eq.s32.totalorder %s31, 0
      %p172 = por %p170, %p171
      %p173 = scmp.ne.s32.totalorder %s161, %s162
      %p174 = scmp.eq.s32.totalorder %s32, 7
      %p175 = por %p173, %p174
      %p177 = scmp.ne.s32.totalorder %s162, %s176
      %p178 = scmp.eq.s32.totalorder %s32, 0
      %p179 = por %p177, %p178
      %s181 = sadd.s32 %s180, 1
      %p184 = scmp.eq.s32.totalorder %s26, 7
      %p185 = scmp.ne.s32.totalorder %s180, %s182
      %p186 = scmp.eq.s32.totalorder %s26, 0
      %p187 = por %p185, %p186
      %p188 = scmp.ne.s32.totalorder %s180, %s182
      %p189 = scmp.eq.s32.totalorder %s31, 7
      %p190 = por %p188, %p189
      %p191 = scmp.ne.s32.totalorder %s182, %s183
      %p192 = scmp.eq.s32.totalorder %s31, 0
      %p193 = por %p191, %p192
      %p194 = scmp.ne.s32.totalorder %s182, %s183
      %p195 = scmp.eq.s32.totalorder %s32, 7
      %p196 = por %p194, %p195
      %p198 = scmp.ne.s32.totalorder %s183, %s197
      %p199 = scmp.eq.s32.totalorder %s32, 0
      %p200 = por %p198, %p199
      %s202 = sadd.s32 %s201, 1
      %p205 = scmp.eq.s32.totalorder %s26, 7
      %p206 = scmp.ne.s32.totalorder %s201, %s203
      %p207 = scmp.eq.s32.totalorder %s26, 0
      %p208 = por %p206, %p207
      %p209 = scmp.ne.s32.totalorder %s201, %s203
      %p210 = scmp.eq.s32.totalorder %s31, 7
      %p211 = por %p209, %p210
      %p212 = scmp.ne.s32.totalorder %s203, %s204
      %p213 = scmp.eq.s32.totalorder %s31, 0
      %p214 = por %p212, %p213
      %p215 = scmp.ne.s32.totalorder %s203, %s204
      %p216 = scmp.eq.s32.totalorder %s32, 7
      %p217 = por %p215, %p216
      %p219 = scmp.ne.s32.totalorder %s204, %s218
      %p220 = scmp.eq.s32.totalorder %s32, 0
      %p221 = por %p219, %p220
      %s223 = sadd.s32 %s222, 1
      %p226 = scmp.eq.s32.totalorder %s26, 7
      %p227 = scmp.ne.s32.totalorder %s222, %s224
      %p228 = scmp.eq.s32.totalorder %s26, 0
      %p229 = por %p227, %p228
      %p230 = scmp.ne.s32.totalorder %s222, %s224
      %p231 = scmp.eq.s32.totalorder %s31, 7
      %p232 = por %p230, %p231
      %p233 = scmp.ne.s32.totalorder %s224, %s225
      %p234 = scmp.eq.s32.totalorder %s31, 0
      %p235 = por %p233, %p234
      %p236 = scmp.ne.s32.totalorder %s224, %s225
      %p237 = scmp.eq.s32.totalorder %s32, 7
      %p238 = por %p236, %p237
      %p240 = scmp.ne.s32.totalorder %s225, %s239
      %p241 = scmp.eq.s32.totalorder %s32, 0
      %p242 = por %p240, %p241
      %s243 = ssub.s32 %s33, %s45
      %p244 = scmp.eq.s32.totalorder %s243, 0
      %s246 = sadd.s32 %s245, 1
      %s247 = scalar_select %p244, %s245, %s246
      %p250 = pneg %p244
      %p251 = scmp.eq.s32.totalorder %s26, 7
      %p252 = por %p250, %p251
      %p253 = scmp.ne.s32.totalorder %s245, %s248
      %p254 = scmp.eq.s32.totalorder %s26, 0
      %p255 = por %p253, %p254
      %p256 = scmp.ne.s32.totalorder %s245, %s248
      %p257 = scmp.eq.s32.totalorder %s31, 7
      %p258 = por %p256, %p257
      %p259 = scmp.ne.s32.totalorder %s248, %s249
      %p260 = scmp.eq.s32.totalorder %s31, 0
      %p261 = por %p259, %p260
      %p262 = scmp.ne.s32.totalorder %s248, %s249
      %p263 = scmp.eq.s32.totalorder %s32, 7
      %p264 = por %p262, %p263
      %p266 = scmp.ne.s32.totalorder %s249, %s265
      %p267 = scmp.eq.s32.totalorder %s32, 0
      %p268 = por %p266, %p267
      %p269 = scmp.le.s32.totalorder 1, %s26
      %p270 = scmp.lt.s32.totalorder %s26, 9
      %p271 = pnand %p269, %p270
      %p272 = pneg %p271
      // Predicated region
      $region9: #{_sum_gnn_forward.1} parent=5 // pred_check
        _
      $region10: #{_sum_gnn_forward.1} parent=5 // pred_check_branch
        %274 = sbr.rel (%p271) target = $region12
      $region11: #{_sum_gnn_forward.1} parent=5 // pred_region
        %s275 = ssub.s32 %s26, 1
        // Predicated region
        $region13: #{_sum_gnn_forward.1} parent=11 // pred_check
          %p276 = pneg %p151
        $region14: #{_sum_gnn_forward.1} parent=11 // pred_check_branch
          %278 = sbr.rel (%p276) target = $region16
        $region15: #{_sum_gnn_forward.1} parent=11 // pred_region
          _
        $region16: #{_sum_gnn_forward.1} parent=11 // pred_fallthru
          _
        // Predicated region
        $region17: #{_sum_gnn_forward.1} parent=11 // pred_check
          %p279 = pneg %p172
        $region18: #{_sum_gnn_forward.1} parent=11 // pred_check_branch
          %281 = sbr.rel (%p279) target = $region20
        $region19: #{_sum_gnn_forward.1} parent=11 // pred_region
          _
        $region20: #{_sum_gnn_forward.1} parent=11 // pred_fallthru
          _
        // Predicated region
        $region21: #{_sum_gnn_forward.1} parent=11 // pred_check
          %p282 = pneg %p193
        $region22: #{_sum_gnn_forward.1} parent=11 // pred_check_branch
          %284 = sbr.rel (%p282) target = $region24
        $region23: #{_sum_gnn_forward.1} parent=11 // pred_region
          _
        $region24: #{_sum_gnn_forward.1} parent=11 // pred_fallthru
          _
        // Predicated region
        $region25: #{_sum_gnn_forward.1} parent=11 // pred_check
          %p285 = pneg %p214
        $region26: #{_sum_gnn_forward.1} parent=11 // pred_check_branch
          %287 = sbr.rel (%p285) target = $region28
        $region27: #{_sum_gnn_forward.1} parent=11 // pred_region
          _
        $region28: #{_sum_gnn_forward.1} parent=11 // pred_fallthru
          _
        // Predicated region
        $region29: #{_sum_gnn_forward.1} parent=11 // pred_check
          %p288 = pneg %p235
        $region30: #{_sum_gnn_forward.1} parent=11 // pred_check_branch
          %290 = sbr.rel (%p288) target = $region32
        $region31: #{_sum_gnn_forward.1} parent=11 // pred_region
          _
        $region32: #{_sum_gnn_forward.1} parent=11 // pred_fallthru
          _
      $region12: #{_sum_gnn_forward.1} parent=5 // pred_fallthru
        _
      %p291 = scmp.lt.s32.totalorder %s26, 8
      // Predicated region
      $region33: #{_sum_gnn_forward.1} parent=5 // pred_check
        %p292 = pneg %p291
      $region34: #{_sum_gnn_forward.1} parent=5 // pred_check_branch
        %294 = sbr.rel (%p292) target = $region36
      $region35: #{_sum_gnn_forward.1} parent=5 // pred_region
        // Predicated region
        $region37: #{_sum_gnn_forward.1} parent=35 // pred_check
          %p295 = pneg %p66
        $region38: #{_sum_gnn_forward.1} parent=35 // pred_check_branch
          %297 = sbr.rel (%p295) target = $region40
        $region39: #{_sum_gnn_forward.1} parent=35 // pred_region
          %s298 = sand.u32 %s56, 1
          %s299 = sand.u32 %s56, 1
          %s300 = smul.addr %s299, 64
          %s301 = scalar_lea.vmem [#allocation6], %s300
          %s302 = smul.u32 %s33, 4
          %s303 = sadd.s32 %s302, %s34
          %s304 = sld [smem:[#allocation4 + %s303]]
          %s305 = smul.u32 8, %s33
          %s306 = smul.addr %s305, 4
          %s307 = sadd.s32 %s304, %s306
          %s308 = smul.addr %s307, 8
          %s309 = scalar_lea.vmem %s2, %s308
          // Predicated region
          $region41: #{_sum_gnn_forward.1} parent=39 // pred_check
            _
          $region42: #{_sum_gnn_forward.1} parent=39 // pred_check_branch
            %311 = sbr.rel (0) target = $region44
          $region43: #{_sum_gnn_forward.1} parent=39 // pred_region
            // Predicated region
            $region45: #{_sum_gnn_forward.1} parent=43 // pred_check
              _
            $region46: #{_sum_gnn_forward.1} parent=43 // pred_check_branch
              %313 = sbr.rel (0) target = $region48
            $region47: #{_sum_gnn_forward.1} parent=43 // pred_region
              // Predicated region
              $region60: #{_sum_gnn_forward.1} parent=47 // pred_check
                _
              $region61: #{_sum_gnn_forward.1} parent=47 // pred_check_branch
                %342 = sbr.rel (0) target = $region63
              $region62: #{_sum_gnn_forward.1} parent=47 // pred_region
                loop: start=0, step=1, limit=1
                $region64: #{_sum_gnn_forward.1} parent=62 // loop_pre_header
                  _
                $region65: #{_sum_gnn_forward.1} parent=62 // loop_header
                  %s344 = sphi 0, %s348
                  %p345 = scmp.ge.s32.totalorder %s344, 1
                  %s349 = sphi %s309, %s309
                  %s350 = sphi %s301, %s301
                $region66: #{_sum_gnn_forward.1} parent=62 // loop_header_branch
                  %347 = sbr.rel (%p345) target = $region70
                $region67: #{_sum_gnn_forward.1} parent=62 // loop_body
                  %v351 = vld [vmem:[%s349] sm:$0xff]
                  %352 = vst [vmem:[%s350] sm:$0xff] %v351
                  %v353 = vld [vmem:[%s349 + $0x20] sm:$0xff]
                  %354 = vst [vmem:[%s350 + $0x8] sm:$0xff] %v353
                  %v355 = vld [vmem:[%s349 + $0x40] sm:$0xff]
                  %356 = vst [vmem:[%s350 + $0x10] sm:$0xff] %v355
                  %v357 = vld [vmem:[%s349 + $0x60] sm:$0xff]
                  %358 = vst [vmem:[%s350 + $0x18] sm:$0xff] %v357
                  %v359 = vld [vmem:[%s349 + $0x80] sm:$0xff]
                  %360 = vst [vmem:[%s350 + $0x20] sm:$0xff] %v359
                  %v361 = vld [vmem:[%s349 + $0xa0] sm:$0xff]
                  %362 = vst [vmem:[%s350 + $0x28] sm:$0xff] %v361
                  %v363 = vld [vmem:[%s349 + $0xc0] sm:$0xff]
                  %364 = vst [vmem:[%s350 + $0x30] sm:$0xff] %v363
                  %v365 = vld [vmem:[%s349 + $0xe0] sm:$0xff]
                  %366 = vst [vmem:[%s350 + $0x38] sm:$0xff] %v365
                $region68: #{_sum_gnn_forward.1} parent=62 // loop_footer
                  %s348 = sadd.s32 1, %s344
                $region69: #{_sum_gnn_forward.1} parent=62 // loop_footer_branch
                  %343 = sbr.rel target = $region65
                $region70: #{_sum_gnn_forward.1} parent=62 // loop_exit
                  _
              $region63: #{_sum_gnn_forward.1} parent=47 // pred_fallthru
                _
              // Predicated region
              $region71: #{_sum_gnn_forward.1} parent=47 // pred_check
                _
              $region72: #{_sum_gnn_forward.1} parent=47 // pred_check_branch
                %368 = sbr.rel target = $region74
              $region73: #{_sum_gnn_forward.1} parent=47 // pred_region
                _
              $region74: #{_sum_gnn_forward.1} parent=47 // pred_fallthru
                _
            $region48: #{_sum_gnn_forward.1} parent=43 // pred_fallthru
              _
            // Predicated region
            $region49: #{_sum_gnn_forward.1} parent=43 // pred_check
              _
            $region50: #{_sum_gnn_forward.1} parent=43 // pred_check_branch
              %315 = sbr.rel target = $region52
            $region51: #{_sum_gnn_forward.1} parent=43 // pred_region
              loop: start=0, step=1, limit=1
              $region53: #{_sum_gnn_forward.1} parent=51 // loop_pre_header
                _
              $region54: #{_sum_gnn_forward.1} parent=51 // loop_header
                %s318 = sphi 0, %s322
                %p319 = scmp.ge.s32.totalorder %s318, 1
                %s323 = sphi %s309, %s309
                %s324 = sphi %s301, %s301
              $region55: #{_sum_gnn_forward.1} parent=51 // loop_header_branch
                %321 = sbr.rel (%p319) target = $region59
              $region56: #{_sum_gnn_forward.1} parent=51 // loop_body
                %v325 = vld [vmem:[%s323] sm:$0xff]
                %326 = vst [vmem:[%s324] sm:$0xff] %v325
                %v327 = vld [vmem:[%s323 + $0x20] sm:$0xff]
                %328 = vst [vmem:[%s324 + $0x8] sm:$0xff] %v327
                %v329 = vld [vmem:[%s323 + $0x40] sm:$0xff]
                %330 = vst [vmem:[%s324 + $0x10] sm:$0xff] %v329
                %v331 = vld [vmem:[%s323 + $0x60] sm:$0xff]
                %332 = vst [vmem:[%s324 + $0x18] sm:$0xff] %v331
                %v333 = vld [vmem:[%s323 + $0x80] sm:$0xff]
                %334 = vst [vmem:[%s324 + $0x20] sm:$0xff] %v333
                %v335 = vld [vmem:[%s323 + $0xa0] sm:$0xff]
                %336 = vst [vmem:[%s324 + $0x28] sm:$0xff] %v335
                %v337 = vld [vmem:[%s323 + $0xc0] sm:$0xff]
                %338 = vst [vmem:[%s324 + $0x30] sm:$0xff] %v337
                %v339 = vld [vmem:[%s323 + $0xe0] sm:$0xff]
                %340 = vst [vmem:[%s324 + $0x38] sm:$0xff] %v339
              $region57: #{_sum_gnn_forward.1} parent=51 // loop_footer
                %s322 = sadd.s32 1, %s318
              $region58: #{_sum_gnn_forward.1} parent=51 // loop_footer_branch
                %317 = sbr.rel target = $region54
              $region59: #{_sum_gnn_forward.1} parent=51 // loop_exit
                _
            $region52: #{_sum_gnn_forward.1} parent=43 // pred_fallthru
              _
          $region44: #{_sum_gnn_forward.1} parent=39 // pred_fallthru
            _
          %369 = vnop
        $region40: #{_sum_gnn_forward.1} parent=35 // pred_fallthru
          _
        // Predicated region
        $region75: #{_sum_gnn_forward.1} parent=35 // pred_check
          %p370 = pneg %p98
        $region76: #{_sum_gnn_forward.1} parent=35 // pred_check_branch
          %372 = sbr.rel (%p370) target = $region78
        $region77: #{_sum_gnn_forward.1} parent=35 // pred_region
          %s373 = smul.u32 %s33, 4
          %s374 = sadd.s32 %s373, %s34
          %s375 = sld [smem:[#allocation4 + %s374]]
          %s376 = smul.u32 16, %s375
          %p377 = scmp.lt.s32.totalorder %s376, 63
          %s378 = scalar_select %p377, %s376, 63
          %s379 = smul.addr %s378, 4
          %s380 = scalar_lea.vmem %s3, %s379
          %s381 = smul.u32 %s33, 4
          %s382 = sadd.s32 %s381, %s34
          %s383 = sld [smem:[#allocation4 + %s382]]
          %s384 = smul.u32 16, %s383
        $region78: #{_sum_gnn_forward.1} parent=35 // pred_fallthru
          _
        // Predicated region
        $region79: #{_sum_gnn_forward.1} parent=35 // pred_check
          %p385 = pneg %p124
        $region80: #{_sum_gnn_forward.1} parent=35 // pred_check_branch
          %387 = sbr.rel (%p385) target = $region82
        $region81: #{_sum_gnn_forward.1} parent=35 // pred_region
          %s388 = smul.u32 32, %s33
          %p389 = scmp.lt.s32.totalorder %s388, 63
          %s390 = scalar_select %p389, %s388, 63
          %s391 = smul.addr %s390, 8
          %s392 = scalar_lea.vmem %s4, %s391
          %s393 = smul.u32 32, %s33
        $region82: #{_sum_gnn_forward.1} parent=35 // pred_fallthru
          _
      $region36: #{_sum_gnn_forward.1} parent=5 // pred_fallthru
        _
      %p394 = scmp.le.s32.totalorder 1, %s26
      %p395 = scmp.lt.s32.totalorder %s26, 9
      %p396 = pnand %p394, %p395
      %p397 = pneg %p396
      // Predicated region
      $region83: #{_sum_gnn_forward.1} parent=5 // pred_check
        _
      $region84: #{_sum_gnn_forward.1} parent=5 // pred_check_branch
        %399 = sbr.rel (%p396) target = $region86
      $region85: #{_sum_gnn_forward.1} parent=5 // pred_region
        %s400 = ssub.s32 %s26, 1
        %s401 = sand.u32 %s59, 1
        %s402 = sand.u32 %s59, 1
        %s403 = smul.addr %s402, 64
        %s404 = scalar_lea.vmem [#allocation6], %s403
        // Predicated region
        $region87: #{_sum_gnn_forward.1} parent=85 // pred_check
          %p405 = pneg %p72
        $region88: #{_sum_gnn_forward.1} parent=85 // pred_check_branch
          %407 = sbr.rel (%p405) target = $region90
        $region89: #{_sum_gnn_forward.1} parent=85 // pred_region
          _
        $region90: #{_sum_gnn_forward.1} parent=85 // pred_fallthru
          _
        %s408 = sand.u32 %s59, 1
        %s409 = sand.u32 %s59, 1
        %s410 = smul.addr %s409, 64
        %s411 = scalar_lea.vmem [#allocation6], %s410
        %p412 = pneg %p72
        %p413 = pneg %p69
        %s414 = smul.u32 %s35, 4
        %s415 = sadd.s32 %s414, %s36
        %s416 = sld [smem:[#allocation4 + %s415]]
        %s417 = smul.u32 16, %s416
        %p418 = scmp.lt.s32.totalorder %s417, 63
        %s419 = scalar_select %p418, %s417, 63
        %s420 = smul.addr %s419, 4
        %s421 = scalar_lea.vmem %s3, %s420
        %p422 = pneg %p104
        %p423 = pneg %p101
        %s424 = smul.u32 32, %s35
        %p425 = scmp.lt.s32.totalorder %s424, 63
        %s426 = scalar_select %p425, %s424, 63
        %s427 = smul.addr %s426, 8
        %s428 = scalar_lea.vmem %s4, %s427
        %p429 = pneg %p130
        %p430 = pneg %p127
        %p431 = pneg %p151
        %p432 = pneg %p148
        %p433 = pneg %p172
        %p434 = pneg %p169
        %p435 = pneg %p193
        %p436 = pneg %p190
        %p437 = pneg %p214
        %p438 = pneg %p211
        %p439 = pneg %p235
        %p440 = pneg %p232
        %p441 = pneg %p261
        %p442 = pneg %p258
        %s443 = smul.u32 32, %s35
        %p444 = scmp.lt.s32.totalorder %s443, 63
        %s445 = scalar_select %p444, %s443, 63
        %s446 = smul.addr %s445, 8
        %s447 = scalar_lea.vmem %s10, %s446
        %s448 = smul.u32 %s35, 4
        %s449 = sadd.s32 %s448, %s36
        %s450 = sld [smem:[#allocation4 + %s449]]
        %s451 = smul.u32 8, %s35
        %s452 = smul.u32 %s35, 4
        %s453 = sadd.s32 %s452, %s36
        %s454 = sld [smem:[#allocation4 + %s453]]
        %s455 = smul.u32 16, %s454
        %p456 = scmp.lt.s32.totalorder %s455, 63
        %s457 = scalar_select %p456, %s455, 63
        %s458 = smul.addr %s457, 4
        %s459 = scalar_lea.vmem %s3, %s458
        %s460 = smul.u32 %s35, 4
        %s461 = sadd.s32 %s460, %s36
        %s462 = sld [smem:[#allocation4 + %s461]]
        %s463 = smul.u32 16, %s462
        %s464 = smul.u32 32, %s35
        %p465 = scmp.lt.s32.totalorder %s464, 63
        %s466 = scalar_select %p465, %s464, 63
        %s467 = smul.addr %s466, 8
        %s468 = scalar_lea.vmem %s4, %s467
        %s469 = smul.u32 32, %s35
        %s470 = smul.u32 32, %s35
        %p471 = scmp.lt.s32.totalorder %s470, 63
        %s472 = scalar_select %p471, %s470, 63
        %s473 = smul.addr %s472, 8
        %s474 = scalar_lea.vmem %s10, %s473
        %s475 = smul.u32 32, %s35
        %p477 = scmp.eq.s32.totalorder %s36, 0
        // Predicated region
        $region91: #{_sum_gnn_forward.1} parent=85 // pred_check
          %p478 = pneg %p477
        $region92: #{_sum_gnn_forward.1} parent=85 // pred_check_branch
          %480 = sbr.rel (%p478) target = $region94
        $region93: #{_sum_gnn_forward.1} parent=85 // pred_region
          %481 = vst [vmem:[#allocation2] sm:$0xff] 0.0
          %482 = vst [vmem:[#allocation2 + $0x8] sm:$0xff] 0.0
          %483 = vst [vmem:[#allocation2 + $0x10] sm:$0xff] 0.0
          %484 = vst [vmem:[#allocation2 + $0x18] sm:$0xff] 0.0
          %485 = vst [vmem:[#allocation2 + $0x20] sm:$0xff] 0.0
          %486 = vst [vmem:[#allocation2 + $0x28] sm:$0xff] 0.0
          %487 = vst [vmem:[#allocation2 + $0x30] sm:$0xff] 0.0
          %488 = vst [vmem:[#allocation2 + $0x38] sm:$0xff] 0.0
          %489 = vst [vmem:[#allocation2 + $0x40] sm:$0xff] 0.0
          %490 = vst [vmem:[#allocation2 + $0x48] sm:$0xff] 0.0
          %491 = vst [vmem:[#allocation2 + $0x50] sm:$0xff] 0.0
          %492 = vst [vmem:[#allocation2 + $0x58] sm:$0xff] 0.0
          %493 = vst [vmem:[#allocation2 + $0x60] sm:$0xff] 0.0
          %494 = vst [vmem:[#allocation2 + $0x68] sm:$0xff] 0.0
          %495 = vst [vmem:[#allocation2 + $0x70] sm:$0xff] 0.0
          %496 = vst [vmem:[#allocation2 + $0x78] sm:$0xff] 0.0
          %497 = vst [vmem:[#allocation2 + $0x80] sm:$0xff] 0.0
          %498 = vst [vmem:[#allocation2 + $0x88] sm:$0xff] 0.0
          %499 = vst [vmem:[#allocation2 + $0x90] sm:$0xff] 0.0
          %500 = vst [vmem:[#allocation2 + $0x98] sm:$0xff] 0.0
          %501 = vst [vmem:[#allocation2 + $0xa0] sm:$0xff] 0.0
          %502 = vst [vmem:[#allocation2 + $0xa8] sm:$0xff] 0.0
          %503 = vst [vmem:[#allocation2 + $0xb0] sm:$0xff] 0.0
          %504 = vst [vmem:[#allocation2 + $0xb8] sm:$0xff] 0.0
          %505 = vst [vmem:[#allocation2 + $0xc0] sm:$0xff] 0.0
          %506 = vst [vmem:[#allocation2 + $0xc8] sm:$0xff] 0.0
          %507 = vst [vmem:[#allocation2 + $0xd0] sm:$0xff] 0.0
          %508 = vst [vmem:[#allocation2 + $0xd8] sm:$0xff] 0.0
          %509 = vst [vmem:[#allocation2 + $0xe0] sm:$0xff] 0.0
          %510 = vst [vmem:[#allocation2 + $0xe8] sm:$0xff] 0.0
          %511 = vst [vmem:[#allocation2 + $0xf0] sm:$0xff] 0.0
          %512 = vst [vmem:[#allocation2 + $0xf8] sm:$0xff] 0.0
        $region94: #{_sum_gnn_forward.1} parent=85 // pred_fallthru
          _
        %s513 = sld [smem:[#allocation5 + %s35]]
        %p514 = scmp.lt.s32.totalorder %s36, %s513
        // Predicated region
        $region95: #{_sum_gnn_forward.1} parent=85 // pred_check
          %p515 = pneg %p514
        $region96: #{_sum_gnn_forward.1} parent=85 // pred_check_branch
          %517 = sbr.rel (%p515) target = $region98
        $region97: #{_sum_gnn_forward.1} parent=85 // pred_region
          %v518 = vld [vmem:[%s404] sm:$0xff]
          %v519 = vld [vmem:[%s404 + $0x8] sm:$0xff]
          %v520 = vld [vmem:[%s404 + $0x10] sm:$0xff]
          %v521 = vld [vmem:[%s404 + $0x18] sm:$0xff]
          %v522 = vld [vmem:[%s404 + $0x20] sm:$0xff]
          %v523 = vld [vmem:[%s404 + $0x28] sm:$0xff]
          %v524 = vld [vmem:[%s404 + $0x30] sm:$0xff]
          %v525 = vld [vmem:[%s404 + $0x38] sm:$0xff]
          %v526 = vunpack.c.l.s8.bf16 %v518
          %v527 = vunpack.c.h.s8.bf16 %v518
          %v528 = vunpack.c.l.s8.bf16 %v519
          %v529 = vunpack.c.h.s8.bf16 %v519
          %v530 = vunpack.c.l.s8.bf16 %v520
          %v531 = vunpack.c.h.s8.bf16 %v520
          %v532 = vunpack.c.l.s8.bf16 %v521
          %v533 = vunpack.c.h.s8.bf16 %v521
          %v534 = vunpack.c.l.s8.bf16 %v522
          %v535 = vunpack.c.h.s8.bf16 %v522
          %v536 = vunpack.c.l.s8.bf16 %v523
          %v537 = vunpack.c.h.s8.bf16 %v523
          %v538 = vunpack.c.l.s8.bf16 %v524
          %v539 = vunpack.c.h.s8.bf16 %v524
          %v540 = vunpack.c.l.s8.bf16 %v525
          %v541 = vunpack.c.h.s8.bf16 %v525
          %v542 = vld [vmem:[#allocation2] sm:$0xff]
          %v543 = vld [vmem:[#allocation2 + $0x8] sm:$0xff]
          %v544 = vld [vmem:[#allocation2 + $0x10] sm:$0xff]
          %v545 = vld [vmem:[#allocation2 + $0x18] sm:$0xff]
          %v546 = vld [vmem:[#allocation2 + $0x20] sm:$0xff]
          %v547 = vld [vmem:[#allocation2 + $0x28] sm:$0xff]
          %v548 = vld [vmem:[#allocation2 + $0x30] sm:$0xff]
          %v549 = vld [vmem:[#allocation2 + $0x38] sm:$0xff]
          %v550 = vld [vmem:[#allocation2 + $0x40] sm:$0xff]
          %v551 = vld [vmem:[#allocation2 + $0x48] sm:$0xff]
          %v552 = vld [vmem:[#allocation2 + $0x50] sm:$0xff]
          %v553 = vld [vmem:[#allocation2 + $0x58] sm:$0xff]
          %v554 = vld [vmem:[#allocation2 + $0x60] sm:$0xff]
          %v555 = vld [vmem:[#allocation2 + $0x68] sm:$0xff]
          %v556 = vld [vmem:[#allocation2 + $0x70] sm:$0xff]
          %v557 = vld [vmem:[#allocation2 + $0x78] sm:$0xff]
          %v558 = vld [vmem:[#allocation2 + $0x80] sm:$0xff]
          %v559 = vld [vmem:[#allocation2 + $0x88] sm:$0xff]
          %v560 = vld [vmem:[#allocation2 + $0x90] sm:$0xff]
          %v561 = vld [vmem:[#allocation2 + $0x98] sm:$0xff]
          %v562 = vld [vmem:[#allocation2 + $0xa0] sm:$0xff]
          %v563 = vld [vmem:[#allocation2 + $0xa8] sm:$0xff]
          %v564 = vld [vmem:[#allocation2 + $0xb0] sm:$0xff]
          %v565 = vld [vmem:[#allocation2 + $0xb8] sm:$0xff]
          %v566 = vld [vmem:[#allocation2 + $0xc0] sm:$0xff]
          %v567 = vld [vmem:[#allocation2 + $0xc8] sm:$0xff]
          %v568 = vld [vmem:[#allocation2 + $0xd0] sm:$0xff]
          %v569 = vld [vmem:[#allocation2 + $0xd8] sm:$0xff]
          %v570 = vld [vmem:[#allocation2 + $0xe0] sm:$0xff]
          %v571 = vld [vmem:[#allocation2 + $0xe8] sm:$0xff]
          %v572 = vld [vmem:[#allocation2 + $0xf0] sm:$0xff]
          %v573 = vld [vmem:[#allocation2 + $0xf8] sm:$0xff]
          %v574 = vld [vmem:[%s459] sm:$0xf]
          %v575 = vld [vmem:[%s459 + $0x4] sm:$0xf]
          %v576 = vld [vmem:[%s459 + $0x8] sm:$0xf]
          %v577 = vld [vmem:[%s459 + $0xc] sm:$0xf]
          %v578 = vld [vmem:[%s459 + $0x10] sm:$0xf]
          %v579 = vld [vmem:[%s459 + $0x14] sm:$0xf]
          %v580 = vld [vmem:[%s459 + $0x18] sm:$0xf]
          %v581 = vld [vmem:[%s459 + $0x1c] sm:$0xf]
          %v582 = vld [vmem:[%s459 + $0x20] sm:$0xf]
          %v583 = vld [vmem:[%s459 + $0x24] sm:$0xf]
          %v584 = vld [vmem:[%s459 + $0x28] sm:$0xf]
          %v585 = vld [vmem:[%s459 + $0x2c] sm:$0xf]
          %v586 = vld [vmem:[%s459 + $0x30] sm:$0xf]
          %v587 = vld [vmem:[%s459 + $0x34] sm:$0xf]
          %v588 = vld [vmem:[%s459 + $0x38] sm:$0xf]
          %v589 = vld [vmem:[%s459 + $0x3c] sm:$0xf]
          %v606 = vunpack.c.l.b16 %v574
          %v607 = vunpack.c.l.b16 %v575
          %v608 = vunpack.c.l.b16 %v576
          %v609 = vunpack.c.l.b16 %v577
          %v610 = vunpack.c.l.b16 %v578
          %v611 = vunpack.c.l.b16 %v579
          %v612 = vunpack.c.l.b16 %v580
          %v613 = vunpack.c.l.b16 %v581
          %v614 = vunpack.c.l.b16 %v582
          %v615 = vunpack.c.l.b16 %v583
          %v616 = vunpack.c.l.b16 %v584
          %v617 = vunpack.c.l.b16 %v585
          %v618 = vunpack.c.l.b16 %v586
          %v619 = vunpack.c.l.b16 %v587
          %v620 = vunpack.c.l.b16 %v588
          %v621 = vunpack.c.l.b16 %v589
          %v622 = vpack.c.b16 %v607, %v606
          %v623 = vpack.c.b16 %v609, %v608
          %v624 = vpack.c.b16 %v611, %v610
          %v625 = vpack.c.b16 %v613, %v612
          %v626 = vpack.c.b16 %v615, %v614
          %v627 = vpack.c.b16 %v617, %v616
          %v628 = vpack.c.b16 %v619, %v618
          %v629 = vpack.c.b16 %v621, %v620
          %638 = vmatprep.subr.bf16.mxu0 0
          %639 = vmatpush1.bf16.msra.mxu0 %v622
          %640 = vmatprep.subr.bf16.mxu0 0
          %641 = vmatpush1.bf16.msra.mxu0 %v623
          %642 = vmatprep.subr.bf16.mxu0 0
          %643 = vmatpush1.bf16.msra.mxu0 %v624
          %644 = vmatprep.subr.bf16.mxu0 0
          %645 = vmatpush1.bf16.msra.mxu0 %v625
          %646 = vmatprep.subr.bf16.mxu0 0
          %647 = vmatpush1.bf16.msra.mxu0 %v626
          %648 = vmatprep.subr.bf16.mxu0 0
          %649 = vmatpush1.bf16.msra.mxu0 %v627
          %650 = vmatprep.subr.bf16.mxu0 0
          %651 = vmatpush1.bf16.msra.mxu0 %v628
          %652 = vmatprep.subr.bf16.mxu0 0
          %653 = vmatpush1.bf16.msra.mxu0 %v629
          %654 = vmatprep.subr.bf16.mxu0 0
          %655 = vmatpush1.bf16.msra.mxu0 0
          %656 = vmatprep.subr.bf16.mxu0 0
          %657 = vmatpush1.bf16.msra.mxu0 0
          %658 = vmatprep.subr.bf16.mxu0 0
          %659 = vmatpush1.bf16.msra.mxu0 0
          %660 = vmatprep.subr.bf16.mxu0 0
          %661 = vmatpush1.bf16.msra.mxu0 0
          %662 = vmatprep.subr.bf16.mxu0 0
          %663 = vmatpush1.bf16.msra.mxu0 0
          %664 = vmatprep.subr.bf16.mxu0 0
          %665 = vmatpush1.bf16.msra.mxu0 0
          %666 = vmatprep.subr.bf16.mxu0 0
          %667 = vmatpush1.bf16.msra.mxu0 0
          %668 = vmatprep.subr.bf16.mxu0 0
          %669 = vmatpush1.bf16.msra.mxu0 0
          %670 = vmatprep.mubr.bf16.mxu0 0
          %671 = vmatmul.mubr.bf16.gmra.mrb[0].mxu0 %v526
          %v672 = vpop.f32.mrb[0].mxu0
          %v673 = vadd.f32 0.0, %v672
          %v674 = vpop.f32.mrb[0].mxu0
          %v675 = vpop.f32.mrb[0].mxu0
          %v676 = vadd.f32 0.0, %v675
          %v677 = vpop.f32.mrb[0].mxu0
          %678 = vmatprep.mubr.bf16.mxu0 0
          %679 = vmatmul.mubr.bf16.gmra.mrb[0].mxu0 %v527
          %v680 = vpop.f32.mrb[0].mxu0
          %v681 = vadd.f32 0.0, %v680
          %v682 = vpop.f32.mrb[0].mxu0
          %v683 = vpop.f32.mrb[0].mxu0
          %v684 = vadd.f32 0.0, %v683
          %v685 = vpop.f32.mrb[0].mxu0
          %686 = vmatprep.mubr.bf16.mxu0 0
          %687 = vmatmul.mubr.bf16.gmra.mrb[0].mxu0 %v528
          %v688 = vpop.f32.mrb[0].mxu0
          %v689 = vadd.f32 0.0, %v688
          %v690 = vpop.f32.mrb[0].mxu0
          %v691 = vpop.f32.mrb[0].mxu0
          %v692 = vadd.f32 0.0, %v691
          %v693 = vpop.f32.mrb[0].mxu0
          %694 = vmatprep.mubr.bf16.mxu0 0
          %695 = vmatmul.mubr.bf16.gmra.mrb[0].mxu0 %v529
          %v696 = vpop.f32.mrb[0].mxu0
          %v697 = vadd.f32 0.0, %v696
          %v698 = vpop.f32.mrb[0].mxu0
          %v699 = vpop.f32.mrb[0].mxu0
          %v700 = vadd.f32 0.0, %v699
          %v701 = vpop.f32.mrb[0].mxu0
          %702 = vmatprep.mubr.bf16.mxu0 0
          %703 = vmatmul.mubr.bf16.gmra.mrb[0].mxu0 %v530
          %v704 = vpop.f32.mrb[0].mxu0
          %v705 = vadd.f32 0.0, %v704
          %v706 = vpop.f32.mrb[0].mxu0
          %v707 = vpop.f32.mrb[0].mxu0
          %v708 = vadd.f32 0.0, %v707
          %v709 = vpop.f32.mrb[0].mxu0
          %710 = vmatprep.mubr.bf16.mxu0 0
          %711 = vmatmul.mubr.bf16.gmra.mrb[0].mxu0 %v531
          %v712 = vpop.f32.mrb[0].mxu0
          %v713 = vadd.f32 0.0, %v712
          %v714 = vpop.f32.mrb[0].mxu0
          %v715 = vpop.f32.mrb[0].mxu0
          %v716 = vadd.f32 0.0, %v715
          %v717 = vpop.f32.mrb[0].mxu0
          %718 = vmatprep.mubr.bf16.mxu0 0
          %719 = vmatmul.mubr.bf16.gmra.mrb[0].mxu0 %v532
          %v720 = vpop.f32.mrb[0].mxu0
          %v721 = vadd.f32 0.0, %v720
          %v722 = vpop.f32.mrb[0].mxu0
          %v723 = vpop.f32.mrb[0].mxu0
          %v724 = vadd.f32 0.0, %v723
          %v725 = vpop.f32.mrb[0].mxu0
          %726 = vmatprep.mubr.bf16.mxu0 0
          %727 = vmatmul.mubr.bf16.gmra.mrb[0].mxu0 %v533
          %v728 = vpop.f32.mrb[0].mxu0
          %v729 = vadd.f32 0.0, %v728
          %v730 = vpop.f32.mrb[0].mxu0
          %v731 = vpop.f32.mrb[0].mxu0
          %v732 = vadd.f32 0.0, %v731
          %v733 = vpop.f32.mrb[0].mxu0
          %734 = vmatprep.mubr.bf16.mxu0 0
          %735 = vmatmul.mubr.bf16.gmra.mrb[0].mxu0 %v534
          %v736 = vpop.f32.mrb[0].mxu0
          %v737 = vadd.f32 0.0, %v736
          %v738 = vpop.f32.mrb[0].mxu0
          %v739 = vpop.f32.mrb[0].mxu0
          %v740 = vadd.f32 0.0, %v739
          %v741 = vpop.f32.mrb[0].mxu0
          %742 = vmatprep.mubr.bf16.mxu0 0
          %743 = vmatmul.mubr.bf16.gmra.mrb[0].mxu0 %v535
          %v744 = vpop.f32.mrb[0].mxu0
          %v745 = vadd.f32 0.0, %v744
          %v746 = vpop.f32.mrb[0].mxu0
          %v747 = vpop.f32.mrb[0].mxu0
          %v748 = vadd.f32 0.0, %v747
          %v749 = vpop.f32.mrb[0].mxu0
          %750 = vmatprep.mubr.bf16.mxu0 0
          %751 = vmatmul.mubr.bf16.gmra.mrb[0].mxu0 %v536
          %v752 = vpop.f32.mrb[0].mxu0
          %v753 = vadd.f32 0.0, %v752
          %v754 = vpop.f32.mrb[0].mxu0
          %v755 = vpop.f32.mrb[0].mxu0
          %v756 = vadd.f32 0.0, %v755
          %v757 = vpop.f32.mrb[0].mxu0
          %758 = vmatprep.mubr.bf16.mxu0 0
          %759 = vmatmul.mubr.bf16.gmra.mrb[0].mxu0 %v537
          %v760 = vpop.f32.mrb[0].mxu0
          %v761 = vadd.f32 0.0, %v760
          %v762 = vpop.f32.mrb[0].mxu0
          %v763 = vpop.f32.mrb[0].mxu0
          %v764 = vadd.f32 0.0, %v763
          %v765 = vpop.f32.mrb[0].mxu0
          %766 = vmatprep.mubr.bf16.mxu0 0
          %767 = vmatmul.mubr.bf16.gmra.mrb[0].mxu0 %v538
          %v768 = vpop.f32.mrb[0].mxu0
          %v769 = vadd.f32 0.0, %v768
          %v770 = vpop.f32.mrb[0].mxu0
          %v771 = vpop.f32.mrb[0].mxu0
          %v772 = vadd.f32 0.0, %v771
          %v773 = vpop.f32.mrb[0].mxu0
          %774 = vmatprep.mubr.bf16.mxu0 0
          %775 = vmatmul.mubr.bf16.gmra.mrb[0].mxu0 %v539
          %v776 = vpop.f32.mrb[0].mxu0
          %v777 = vadd.f32 0.0, %v776
          %v778 = vpop.f32.mrb[0].mxu0
          %v779 = vpop.f32.mrb[0].mxu0
          %v780 = vadd.f32 0.0, %v779
          %v781 = vpop.f32.mrb[0].mxu0
          %782 = vmatprep.mubr.bf16.mxu0 0
          %783 = vmatmul.mubr.bf16.gmra.mrb[0].mxu0 %v540
          %v784 = vpop.f32.mrb[0].mxu0
          %v785 = vadd.f32 0.0, %v784
          %v786 = vpop.f32.mrb[0].mxu0
          %v787 = vpop.f32.mrb[0].mxu0
          %v788 = vadd.f32 0.0, %v787
          %v789 = vpop.f32.mrb[0].mxu0
          %790 = vmatprep.mubr.bf16.mxu0 0
          %791 = vmatmul.mubr.bf16.gmra.mrb[0].mxu0 %v541
          %v792 = vpop.f32.mrb[0].mxu0
          %v793 = vadd.f32 0.0, %v792
          %v794 = vpop.f32.mrb[0].mxu0
          %v795 = vpop.f32.mrb[0].mxu0
          %v796 = vadd.f32 0.0, %v795
          %v797 = vpop.f32.mrb[0].mxu0
          %798 = vdwg.mxu0
          %v799 = vadd.f32 %v542, %v673
          %v800 = vadd.f32 %v543, %v676
          %v801 = vadd.f32 %v544, %v681
          %v802 = vadd.f32 %v545, %v684
          %v803 = vadd.f32 %v546, %v689
          %v804 = vadd.f32 %v547, %v692
          %v805 = vadd.f32 %v548, %v697
          %v806 = vadd.f32 %v549, %v700
          %v807 = vadd.f32 %v550, %v705
          %v808 = vadd.f32 %v551, %v708
          %v809 = vadd.f32 %v552, %v713
          %v810 = vadd.f32 %v553, %v716
          %v811 = vadd.f32 %v554, %v721
          %v812 = vadd.f32 %v555, %v724
          %v813 = vadd.f32 %v556, %v729
          %v814 = vadd.f32 %v557, %v732
          %v815 = vadd.f32 %v558, %v737
          %v816 = vadd.f32 %v559, %v740
          %v817 = vadd.f32 %v560, %v745
          %v818 = vadd.f32 %v561, %v748
          %v819 = vadd.f32 %v562, %v753
          %v820 = vadd.f32 %v563, %v756
          %v821 = vadd.f32 %v564, %v761
          %v822 = vadd.f32 %v565, %v764
          %v823 = vadd.f32 %v566, %v769
          %v824 = vadd.f32 %v567, %v772
          %v825 = vadd.f32 %v568, %v777
          %v826 = vadd.f32 %v569, %v780
          %v827 = vadd.f32 %v570, %v785
          %v828 = vadd.f32 %v571, %v788
          %v829 = vadd.f32 %v572, %v793
          %v830 = vadd.f32 %v573, %v796
          %831 = vst [vmem:[#allocation2] sm:$0xff] %v799
          %832 = vst [vmem:[#allocation2 + $0x8] sm:$0xff] %v800
          %833 = vst [vmem:[#allocation2 + $0x10] sm:$0xff] %v801
          %834 = vst [vmem:[#allocation2 + $0x18] sm:$0xff] %v802
          %835 = vst [vmem:[#allocation2 + $0x20] sm:$0xff] %v803
          %836 = vst [vmem:[#allocation2 + $0x28] sm:$0xff] %v804
          %837 = vst [vmem:[#allocation2 + $0x30] sm:$0xff] %v805
          %838 = vst [vmem:[#allocation2 + $0x38] sm:$0xff] %v806
          %839 = vst [vmem:[#allocation2 + $0x40] sm:$0xff] %v807
          %840 = vst [vmem:[#allocation2 + $0x48] sm:$0xff] %v808
          %841 = vst [vmem:[#allocation2 + $0x50] sm:$0xff] %v809
          %842 = vst [vmem:[#allocation2 + $0x58] sm:$0xff] %v810
          %843 = vst [vmem:[#allocation2 + $0x60] sm:$0xff] %v811
          %844 = vst [vmem:[#allocation2 + $0x68] sm:$0xff] %v812
          %845 = vst [vmem:[#allocation2 + $0x70] sm:$0xff] %v813
          %846 = vst [vmem:[#allocation2 + $0x78] sm:$0xff] %v814
          %847 = vst [vmem:[#allocation2 + $0x80] sm:$0xff] %v815
          %848 = vst [vmem:[#allocation2 + $0x88] sm:$0xff] %v816
          %849 = vst [vmem:[#allocation2 + $0x90] sm:$0xff] %v817
          %850 = vst [vmem:[#allocation2 + $0x98] sm:$0xff] %v818
          %851 = vst [vmem:[#allocation2 + $0xa0] sm:$0xff] %v819
          %852 = vst [vmem:[#allocation2 + $0xa8] sm:$0xff] %v820
          %853 = vst [vmem:[#allocation2 + $0xb0] sm:$0xff] %v821
          %854 = vst [vmem:[#allocation2 + $0xb8] sm:$0xff] %v822
          %855 = vst [vmem:[#allocation2 + $0xc0] sm:$0xff] %v823
          %856 = vst [vmem:[#allocation2 + $0xc8] sm:$0xff] %v824
          %857 = vst [vmem:[#allocation2 + $0xd0] sm:$0xff] %v825
          %858 = vst [vmem:[#allocation2 + $0xd8] sm:$0xff] %v826
          %859 = vst [vmem:[#allocation2 + $0xe0] sm:$0xff] %v827
          %860 = vst [vmem:[#allocation2 + $0xe8] sm:$0xff] %v828
          %861 = vst [vmem:[#allocation2 + $0xf0] sm:$0xff] %v829
          %862 = vst [vmem:[#allocation2 + $0xf8] sm:$0xff] %v830
        $region98: #{_sum_gnn_forward.1} parent=85 // pred_fallthru
          _
        %p863 = scmp.eq.s32.totalorder %s36, 3
        // Predicated region
        $region99: #{_sum_gnn_forward.1} parent=85 // pred_check
          %p864 = pneg %p863
        $region100: #{_sum_gnn_forward.1} parent=85 // pred_check_branch
          %866 = sbr.rel (%p864) target = $region102
        $region101: #{_sum_gnn_forward.1} parent=85 // pred_region
          %v867 = vld [vmem:[%s468] sm:$0xff]
          %v868 = vld [vmem:[%s468 + $0x8] sm:$0xff]
          %v869 = vld [vmem:[%s468 + $0x10] sm:$0xff]
          %v870 = vld [vmem:[%s468 + $0x18] sm:$0xff]
          %v871 = vld [vmem:[%s468 + $0x20] sm:$0xff]
          %v872 = vld [vmem:[%s468 + $0x28] sm:$0xff]
          %v873 = vld [vmem:[%s468 + $0x30] sm:$0xff]
          %v874 = vld [vmem:[%s468 + $0x38] sm:$0xff]
          %v875 = vld [vmem:[%s468 + $0x40] sm:$0xff]
          %v876 = vld [vmem:[%s468 + $0x48] sm:$0xff]
          %v877 = vld [vmem:[%s468 + $0x50] sm:$0xff]
          %v878 = vld [vmem:[%s468 + $0x58] sm:$0xff]
          %v879 = vld [vmem:[%s468 + $0x60] sm:$0xff]
          %v880 = vld [vmem:[%s468 + $0x68] sm:$0xff]
          %v881 = vld [vmem:[%s468 + $0x70] sm:$0xff]
          %v882 = vld [vmem:[%s468 + $0x78] sm:$0xff]
          %v883 = vld [vmem:[%s468 + $0x80] sm:$0xff]
          %v884 = vld [vmem:[%s468 + $0x88] sm:$0xff]
          %v885 = vld [vmem:[%s468 + $0x90] sm:$0xff]
          %v886 = vld [vmem:[%s468 + $0x98] sm:$0xff]
          %v887 = vld [vmem:[%s468 + $0xa0] sm:$0xff]
          %v888 = vld [vmem:[%s468 + $0xa8] sm:$0xff]
          %v889 = vld [vmem:[%s468 + $0xb0] sm:$0xff]
          %v890 = vld [vmem:[%s468 + $0xb8] sm:$0xff]
          %v891 = vld [vmem:[%s468 + $0xc0] sm:$0xff]
          %v892 = vld [vmem:[%s468 + $0xc8] sm:$0xff]
          %v893 = vld [vmem:[%s468 + $0xd0] sm:$0xff]
          %v894 = vld [vmem:[%s468 + $0xd8] sm:$0xff]
          %v895 = vld [vmem:[%s468 + $0xe0] sm:$0xff]
          %v896 = vld [vmem:[%s468 + $0xe8] sm:$0xff]
          %v897 = vld [vmem:[%s468 + $0xf0] sm:$0xff]
          %v898 = vld [vmem:[%s468 + $0xf8] sm:$0xff]
          %v899 = vld [vmem:[%s5] sm:$0xff]
          %v900 = vld [vmem:[%s5 + $0x8] sm:$0xff]
          %v901 = vld [vmem:[%s5 + $0x10] sm:$0xff]
          %v902 = vld [vmem:[%s5 + $0x18] sm:$0xff]
          %v903 = vld [vmem:[%s5 + $0x20] sm:$0xff]
          %v904 = vld [vmem:[%s5 + $0x28] sm:$0xff]
          %v905 = vld [vmem:[%s5 + $0x30] sm:$0xff]
          %v906 = vld [vmem:[%s5 + $0x38] sm:$0xff]
          %v907 = vld [vmem:[%s5 + $0x40] sm:$0xff]
          %v908 = vld [vmem:[%s5 + $0x48] sm:$0xff]
          %v909 = vld [vmem:[%s5 + $0x50] sm:$0xff]
          %v910 = vld [vmem:[%s5 + $0x58] sm:$0xff]
          %v911 = vld [vmem:[%s5 + $0x60] sm:$0xff]
          %v912 = vld [vmem:[%s5 + $0x68] sm:$0xff]
          %v913 = vld [vmem:[%s5 + $0x70] sm:$0xff]
          %v914 = vld [vmem:[%s5 + $0x78] sm:$0xff]
          %v915 = vld [vmem:[#allocation2] sm:$0xff]
          %v916 = vld [vmem:[#allocation2 + $0x8] sm:$0xff]
          %v917 = vld [vmem:[#allocation2 + $0x10] sm:$0xff]
          %v918 = vld [vmem:[#allocation2 + $0x18] sm:$0xff]
          %v919 = vld [vmem:[#allocation2 + $0x20] sm:$0xff]
          %v920 = vld [vmem:[#allocation2 + $0x28] sm:$0xff]
          %v921 = vld [vmem:[#allocation2 + $0x30] sm:$0xff]
          %v922 = vld [vmem:[#allocation2 + $0x38] sm:$0xff]
          %v923 = vld [vmem:[#allocation2 + $0x40] sm:$0xff]
          %v924 = vld [vmem:[#allocation2 + $0x48] sm:$0xff]
          %v925 = vld [vmem:[#allocation2 + $0x50] sm:$0xff]
          %v926 = vld [vmem:[#allocation2 + $0x58] sm:$0xff]
          %v927 = vld [vmem:[#allocation2 + $0x60] sm:$0xff]
          %v928 = vld [vmem:[#allocation2 + $0x68] sm:$0xff]
          %v929 = vld [vmem:[#allocation2 + $0x70] sm:$0xff]
          %v930 = vld [vmem:[#allocation2 + $0x78] sm:$0xff]
          %v931 = vld [vmem:[#allocation2 + $0x80] sm:$0xff]
          %v932 = vld [vmem:[#allocation2 + $0x88] sm:$0xff]
          %v933 = vld [vmem:[#allocation2 + $0x90] sm:$0xff]
          %v934 = vld [vmem:[#allocation2 + $0x98] sm:$0xff]
          %v935 = vld [vmem:[#allocation2 + $0xa0] sm:$0xff]
          %v936 = vld [vmem:[#allocation2 + $0xa8] sm:$0xff]
          %v937 = vld [vmem:[#allocation2 + $0xb0] sm:$0xff]
          %v938 = vld [vmem:[#allocation2 + $0xb8] sm:$0xff]
          %v939 = vld [vmem:[#allocation2 + $0xc0] sm:$0xff]
          %v940 = vld [vmem:[#allocation2 + $0xc8] sm:$0xff]
          %v941 = vld [vmem:[#allocation2 + $0xd0] sm:$0xff]
          %v942 = vld [vmem:[#allocation2 + $0xd8] sm:$0xff]
          %v943 = vld [vmem:[#allocation2 + $0xe0] sm:$0xff]
          %v944 = vld [vmem:[#allocation2 + $0xe8] sm:$0xff]
          %v945 = vld [vmem:[#allocation2 + $0xf0] sm:$0xff]
          %v946 = vld [vmem:[#allocation2 + $0xf8] sm:$0xff]
          %v947 = vld [vmem:[%s6] sm:$0xff]
          %v948 = vld [vmem:[%s6 + $0x8] sm:$0xff]
          %v949 = vld [vmem:[%s6 + $0x10] sm:$0xff]
          %v950 = vld [vmem:[%s6 + $0x18] sm:$0xff]
          %v951 = vld [vmem:[%s6 + $0x20] sm:$0xff]
          %v952 = vld [vmem:[%s6 + $0x28] sm:$0xff]
          %v953 = vld [vmem:[%s6 + $0x30] sm:$0xff]
          %v954 = vld [vmem:[%s6 + $0x38] sm:$0xff]
          %v955 = vld [vmem:[%s6 + $0x40] sm:$0xff]
          %v956 = vld [vmem:[%s6 + $0x48] sm:$0xff]
          %v957 = vld [vmem:[%s6 + $0x50] sm:$0xff]
          %v958 = vld [vmem:[%s6 + $0x58] sm:$0xff]
          %v959 = vld [vmem:[%s6 + $0x60] sm:$0xff]
          %v960 = vld [vmem:[%s6 + $0x68] sm:$0xff]
          %v961 = vld [vmem:[%s6 + $0x70] sm:$0xff]
          %v962 = vld [vmem:[%s6 + $0x78] sm:$0xff]
          %963 = vmatprep.subr.mxu0 0.0
          %964 = vmatpush1.msra.mxu0 %v947
          %965 = vmatprep.subr.mxu0 0.0
          %966 = vmatpush1.msra.mxu0 %v948
          %967 = vmatprep.subr.mxu0 0.0
          %968 = vmatpush1.msra.mxu0 %v949
          %969 = vmatprep.subr.mxu0 0.0
          %970 = vmatpush1.msra.mxu0 %v950
          %971 = vmatprep.subr.mxu0 0.0
          %972 = vmatpush1.msra.mxu0 %v951
          %973 = vmatprep.subr.mxu0 0.0
          %974 = vmatpush1.msra.mxu0 %v952
          %975 = vmatprep.subr.mxu0 0.0
          %976 = vmatpush1.msra.mxu0 %v953
          %977 = vmatprep.subr.mxu0 0.0
          %978 = vmatpush1.msra.mxu0 %v954
          %979 = vmatprep.subr.mxu0 0.0
          %980 = vmatpush1.msra.mxu0 %v955
          %981 = vmatprep.subr.mxu0 0.0
          %982 = vmatpush1.msra.mxu0 %v956
          %983 = vmatprep.subr.mxu0 0.0
          %984 = vmatpush1.msra.mxu0 %v957
          %985 = vmatprep.subr.mxu0 0.0
          %986 = vmatpush1.msra.mxu0 %v958
          %987 = vmatprep.subr.mxu0 0.0
          %988 = vmatpush1.msra.mxu0 %v959
          %989 = vmatprep.subr.mxu0 0.0
          %990 = vmatpush1.msra.mxu0 %v960
          %991 = vmatprep.subr.mxu0 0.0
          %992 = vmatpush1.msra.mxu0 %v961
          %993 = vmatprep.subr.mxu0 0.0
          %994 = vmatpush1.msra.mxu0 %v962
          %995 = vmatprep.subr.mxu0 0.0
          %996 = vmatpush1.msra.mxu0 0.0
          %997 = vmatprep.subr.mxu0 0.0
          %998 = vmatpush1.msra.mxu0 0.0
          %999 = vmatprep.subr.mxu0 0.0
          %1000 = vmatpush1.msra.mxu0 0.0
          %1001 = vmatprep.subr.mxu0 0.0
          %1002 = vmatpush1.msra.mxu0 0.0
          %1003 = vmatprep.subr.mxu0 0.0
          %1004 = vmatpush1.msra.mxu0 0.0
          %1005 = vmatprep.subr.mxu0 0.0
          %1006 = vmatpush1.msra.mxu0 0.0
          %1007 = vmatprep.subr.mxu0 0.0
          %1008 = vmatpush1.msra.mxu0 0.0
          %1009 = vmatprep.subr.mxu0 0.0
          %1010 = vmatpush1.msra.mxu0 0.0
          %1011 = vmatprep.subr.mxu0 0.0
          %1012 = vmatpush1.msra.mxu0 0.0
          %1013 = vmatprep.subr.mxu0 0.0
          %1014 = vmatpush1.msra.mxu0 0.0
          %1015 = vmatprep.subr.mxu0 0.0
          %1016 = vmatpush1.msra.mxu0 0.0
          %1017 = vmatprep.subr.mxu0 0.0
          %1018 = vmatpush1.msra.mxu0 0.0
          %1019 = vmatprep.subr.mxu0 0.0
          %1020 = vmatpush1.msra.mxu0 0.0
          %1021 = vmatprep.subr.mxu0 0.0
          %1022 = vmatpush1.msra.mxu0 0.0
          %1023 = vmatprep.subr.mxu0 0.0
          %1024 = vmatpush1.msra.mxu0 0.0
          %1025 = vmatprep.subr.mxu0 0.0
          %1026 = vmatpush1.msra.mxu0 0.0
          %1027 = vmatprep.mubr.f32.mxu0 0.0
          %1028 = vmatmul.mubr.f32.gmra.mrb[0].mxu0 %v915
          %v1029 = vpop.f32.mrb[0].mxu0
          %v1030 = vadd.f32 0.0, %v1029
          %v1031 = vpop.f32.mrb[0].mxu0
          %1032 = vmatprep.mubr.f32.mxu0 0.0
          %1033 = vmatmul.mubr.f32.gmra.mrb[0].mxu0 %v916
          %v1034 = vpop.f32.mrb[0].mxu0
          %v1035 = vadd.f32 0.0, %v1034
          %v1036 = vpop.f32.mrb[0].mxu0
          %1037 = vmatprep.mubr.f32.mxu0 0.0
          %1038 = vmatmul.mubr.f32.gmra.mrb[0].mxu0 %v917
          %v1039 = vpop.f32.mrb[0].mxu0
          %v1040 = vadd.f32 0.0, %v1039
          %v1041 = vpop.f32.mrb[0].mxu0
          %1042 = vmatprep.mubr.f32.mxu0 0.0
          %1043 = vmatmul.mubr.f32.gmra.mrb[0].mxu0 %v918
          %v1044 = vpop.f32.mrb[0].mxu0
          %v1045 = vadd.f32 0.0, %v1044
          %v1046 = vpop.f32.mrb[0].mxu0
          %1047 = vmatprep.mubr.f32.mxu0 0.0
          %1048 = vmatmul.mubr.f32.gmra.mrb[0].mxu0 %v919
          %v1049 = vpop.f32.mrb[0].mxu0
          %v1050 = vadd.f32 0.0, %v1049
          %v1051 = vpop.f32.mrb[0].mxu0
          %1052 = vmatprep.mubr.f32.mxu0 0.0
          %1053 = vmatmul.mubr.f32.gmra.mrb[0].mxu0 %v920
          %v1054 = vpop.f32.mrb[0].mxu0
          %v1055 = vadd.f32 0.0, %v1054
          %v1056 = vpop.f32.mrb[0].mxu0
          %1057 = vmatprep.mubr.f32.mxu0 0.0
          %1058 = vmatmul.mubr.f32.gmra.mrb[0].mxu0 %v921
          %v1059 = vpop.f32.mrb[0].mxu0
          %v1060 = vadd.f32 0.0, %v1059
          %v1061 = vpop.f32.mrb[0].mxu0
          %1062 = vmatprep.mubr.f32.mxu0 0.0
          %1063 = vmatmul.mubr.f32.gmra.mrb[0].mxu0 %v922
          %v1064 = vpop.f32.mrb[0].mxu0
          %v1065 = vadd.f32 0.0, %v1064
          %v1066 = vpop.f32.mrb[0].mxu0
          %1067 = vmatprep.mubr.f32.mxu0 0.0
          %1068 = vmatmul.mubr.f32.gmra.mrb[0].mxu0 %v923
          %v1069 = vpop.f32.mrb[0].mxu0
          %v1070 = vadd.f32 0.0, %v1069
          %v1071 = vpop.f32.mrb[0].mxu0
          %1072 = vmatprep.mubr.f32.mxu0 0.0
          %1073 = vmatmul.mubr.f32.gmra.mrb[0].mxu0 %v924
          %v1074 = vpop.f32.mrb[0].mxu0
          %v1075 = vadd.f32 0.0, %v1074
          %v1076 = vpop.f32.mrb[0].mxu0
          %1077 = vmatprep.mubr.f32.mxu0 0.0
          %1078 = vmatmul.mubr.f32.gmra.mrb[0].mxu0 %v925
          %v1079 = vpop.f32.mrb[0].mxu0
          %v1080 = vadd.f32 0.0, %v1079
          %v1081 = vpop.f32.mrb[0].mxu0
          %1082 = vmatprep.mubr.f32.mxu0 0.0
          %1083 = vmatmul.mubr.f32.gmra.mrb[0].mxu0 %v926
          %v1084 = vpop.f32.mrb[0].mxu0
          %v1085 = vadd.f32 0.0, %v1084
          %v1086 = vpop.f32.mrb[0].mxu0
          %1087 = vmatprep.mubr.f32.mxu0 0.0
          %1088 = vmatmul.mubr.f32.gmra.mrb[0].mxu0 %v927
          %v1089 = vpop.f32.mrb[0].mxu0
          %v1090 = vadd.f32 0.0, %v1089
          %v1091 = vpop.f32.mrb[0].mxu0
          %1092 = vmatprep.mubr.f32.mxu0 0.0
          %1093 = vmatmul.mubr.f32.gmra.mrb[0].mxu0 %v928
          %v1094 = vpop.f32.mrb[0].mxu0
          %v1095 = vadd.f32 0.0, %v1094
          %v1096 = vpop.f32.mrb[0].mxu0
          %1097 = vmatprep.mubr.f32.mxu0 0.0
          %1098 = vmatmul.mubr.f32.gmra.mrb[0].mxu0 %v929
          %v1099 = vpop.f32.mrb[0].mxu0
          %v1100 = vadd.f32 0.0, %v1099
          %v1101 = vpop.f32.mrb[0].mxu0
          %1102 = vmatprep.mubr.f32.mxu0 0.0
          %1103 = vmatmul.mubr.f32.gmra.mrb[0].mxu0 %v930
          %v1104 = vpop.f32.mrb[0].mxu0
          %v1105 = vadd.f32 0.0, %v1104
          %v1106 = vpop.f32.mrb[0].mxu0
          %1107 = vmatprep.mubr.f32.mxu0 0.0
          %1108 = vmatmul.mubr.f32.gmra.mrb[0].mxu0 %v931
          %v1109 = vpop.f32.mrb[0].mxu0
          %v1110 = vadd.f32 0.0, %v1109
          %v1111 = vpop.f32.mrb[0].mxu0
          %1112 = vmatprep.mubr.f32.mxu0 0.0
          %1113 = vmatmul.mubr.f32.gmra.mrb[0].mxu0 %v932
          %v1114 = vpop.f32.mrb[0].mxu0
          %v1115 = vadd.f32 0.0, %v1114
          %v1116 = vpop.f32.mrb[0].mxu0
          %1117 = vmatprep.mubr.f32.mxu0 0.0
          %1118 = vmatmul.mubr.f32.gmra.mrb[0].mxu0 %v933
          %v1119 = vpop.f32.mrb[0].mxu0
          %v1120 = vadd.f32 0.0, %v1119
          %v1121 = vpop.f32.mrb[0].mxu0
          %1122 = vmatprep.mubr.f32.mxu0 0.0
          %1123 = vmatmul.mubr.f32.gmra.mrb[0].mxu0 %v934
          %v1124 = vpop.f32.mrb[0].mxu0
          %v1125 = vadd.f32 0.0, %v1124
          %v1126 = vpop.f32.mrb[0].mxu0
          %1127 = vmatprep.mubr.f32.mxu0 0.0
          %1128 = vmatmul.mubr.f32.gmra.mrb[0].mxu0 %v935
          %v1129 = vpop.f32.mrb[0].mxu0
          %v1130 = vadd.f32 0.0, %v1129
          %v1131 = vpop.f32.mrb[0].mxu0
          %1132 = vmatprep.mubr.f32.mxu0 0.0
          %1133 = vmatmul.mubr.f32.gmra.mrb[0].mxu0 %v936
          %v1134 = vpop.f32.mrb[0].mxu0
          %v1135 = vadd.f32 0.0, %v1134
          %v1136 = vpop.f32.mrb[0].mxu0
          %1137 = vmatprep.mubr.f32.mxu0 0.0
          %1138 = vmatmul.mubr.f32.gmra.mrb[0].mxu0 %v937
          %v1139 = vpop.f32.mrb[0].mxu0
          %v1140 = vadd.f32 0.0, %v1139
          %v1141 = vpop.f32.mrb[0].mxu0
          %1142 = vmatprep.mubr.f32.mxu0 0.0
          %1143 = vmatmul.mubr.f32.gmra.mrb[0].mxu0 %v938
          %v1144 = vpop.f32.mrb[0].mxu0
          %v1145 = vadd.f32 0.0, %v1144
          %v1146 = vpop.f32.mrb[0].mxu0
          %1147 = vmatprep.mubr.f32.mxu0 0.0
          %1148 = vmatmul.mubr.f32.gmra.mrb[0].mxu0 %v939
          %v1149 = vpop.f32.mrb[0].mxu0
          %v1150 = vadd.f32 0.0, %v1149
          %v1151 = vpop.f32.mrb[0].mxu0
          %1152 = vmatprep.mubr.f32.mxu0 0.0
          %1153 = vmatmul.mubr.f32.gmra.mrb[0].mxu0 %v940
          %v1154 = vpop.f32.mrb[0].mxu0
          %v1155 = vadd.f32 0.0, %v1154
          %v1156 = vpop.f32.mrb[0].mxu0
          %1157 = vmatprep.mubr.f32.mxu0 0.0
          %1158 = vmatmul.mubr.f32.gmra.mrb[0].mxu0 %v941
          %v1159 = vpop.f32.mrb[0].mxu0
          %v1160 = vadd.f32 0.0, %v1159
          %v1161 = vpop.f32.mrb[0].mxu0
          %1162 = vmatprep.mubr.f32.mxu0 0.0
          %1163 = vmatmul.mubr.f32.gmra.mrb[0].mxu0 %v942
          %v1164 = vpop.f32.mrb[0].mxu0
          %v1165 = vadd.f32 0.0, %v1164
          %v1166 = vpop.f32.mrb[0].mxu0
          %1167 = vmatprep.mubr.f32.mxu0 0.0
          %1168 = vmatmul.mubr.f32.gmra.mrb[0].mxu0 %v943
          %v1169 = vpop.f32.mrb[0].mxu0
          %v1170 = vadd.f32 0.0, %v1169
          %v1171 = vpop.f32.mrb[0].mxu0
          %1172 = vmatprep.mubr.f32.mxu0 0.0
          %1173 = vmatmul.mubr.f32.gmra.mrb[0].mxu0 %v944
          %v1174 = vpop.f32.mrb[0].mxu0
          %v1175 = vadd.f32 0.0, %v1174
          %v1176 = vpop.f32.mrb[0].mxu0
          %1177 = vmatprep.mubr.f32.mxu0 0.0
          %1178 = vmatmul.mubr.f32.gmra.mrb[0].mxu0 %v945
          %v1179 = vpop.f32.mrb[0].mxu0
          %v1180 = vadd.f32 0.0, %v1179
          %v1181 = vpop.f32.mrb[0].mxu0
          %1182 = vmatprep.mubr.f32.mxu0 0.0
          %1183 = vmatmul.mubr.f32.gmra.mrb[0].mxu0 %v946
          %v1184 = vpop.f32.mrb[0].mxu0
          %v1185 = vadd.f32 0.0, %v1184
          %v1186 = vpop.f32.mrb[0].mxu0
          %1187 = vdwg.mxu0
          %1188 = vmatprep.subr.mxu0 0.0
          %1189 = vmatpush1.msra.mxu0 %v899
          %1190 = vmatprep.subr.mxu0 0.0
          %1191 = vmatpush1.msra.mxu0 %v900
          %1192 = vmatprep.subr.mxu0 0.0
          %1193 = vmatpush1.msra.mxu0 %v901
          %1194 = vmatprep.subr.mxu0 0.0
          %1195 = vmatpush1.msra.mxu0 %v902
          %1196 = vmatprep.subr.mxu0 0.0
          %1197 = vmatpush1.msra.mxu0 %v903
          %1198 = vmatprep.subr.mxu0 0.0
          %1199 = vmatpush1.msra.mxu0 %v904
          %1200 = vmatprep.subr.mxu0 0.0
          %1201 = vmatpush1.msra.mxu0 %v905
          %1202 = vmatprep.subr.mxu0 0.0
          %1203 = vmatpush1.msra.mxu0 %v906
          %1204 = vmatprep.subr.mxu0 0.0
          %1205 = vmatpush1.msra.mxu0 %v907
          %1206 = vmatprep.subr.mxu0 0.0
          %1207 = vmatpush1.msra.mxu0 %v908
          %1208 = vmatprep.subr.mxu0 0.0
          %1209 = vmatpush1.msra.mxu0 %v909
          %1210 = vmatprep.subr.mxu0 0.0
          %1211 = vmatpush1.msra.mxu0 %v910
          %1212 = vmatprep.subr.mxu0 0.0
          %1213 = vmatpush1.msra.mxu0 %v911
          %1214 = vmatprep.subr.mxu0 0.0
          %1215 = vmatpush1.msra.mxu0 %v912
          %1216 = vmatprep.subr.mxu0 0.0
          %1217 = vmatpush1.msra.mxu0 %v913
          %1218 = vmatprep.subr.mxu0 0.0
          %1219 = vmatpush1.msra.mxu0 %v914
          %1220 = vmatprep.subr.mxu0 0.0
          %1221 = vmatpush1.msra.mxu0 0.0
          %1222 = vmatprep.subr.mxu0 0.0
          %1223 = vmatpush1.msra.mxu0 0.0
          %1224 = vmatprep.subr.mxu0 0.0
          %1225 = vmatpush1.msra.mxu0 0.0
          %1226 = vmatprep.subr.mxu0 0.0
          %1227 = vmatpush1.msra.mxu0 0.0
          %1228 = vmatprep.subr.mxu0 0.0
          %1229 = vmatpush1.msra.mxu0 0.0
          %1230 = vmatprep.subr.mxu0 0.0
          %1231 = vmatpush1.msra.mxu0 0.0
          %1232 = vmatprep.subr.mxu0 0.0
          %1233 = vmatpush1.msra.mxu0 0.0
          %1234 = vmatprep.subr.mxu0 0.0
          %1235 = vmatpush1.msra.mxu0 0.0
          %1236 = vmatprep.subr.mxu0 0.0
          %1237 = vmatpush1.msra.mxu0 0.0
          %1238 = vmatprep.subr.mxu0 0.0
          %1239 = vmatpush1.msra.mxu0 0.0
          %1240 = vmatprep.subr.mxu0 0.0
          %1241 = vmatpush1.msra.mxu0 0.0
          %1242 = vmatprep.subr.mxu0 0.0
          %1243 = vmatpush1.msra.mxu0 0.0
          %1244 = vmatprep.subr.mxu0 0.0
          %1245 = vmatpush1.msra.mxu0 0.0
          %1246 = vmatprep.subr.mxu0 0.0
          %1247 = vmatpush1.msra.mxu0 0.0
          %1248 = vmatprep.subr.mxu0 0.0
          %1249 = vmatpush1.msra.mxu0 0.0
          %1250 = vmatprep.subr.mxu0 0.0
          %1251 = vmatpush1.msra.mxu0 0.0
          %1252 = vmatprep.mubr.f32.mxu0 0.0
          %1253 = vmatmul.mubr.f32.gmra.mrb[0].mxu0 %v867
          %v1254 = vpop.f32.mrb[0].mxu0
          %v1255 = vadd.f32 %v1030, %v1254
          %v1256 = vpop.f32.mrb[0].mxu0
          %1257 = vmatprep.mubr.f32.mxu0 0.0
          %1258 = vmatmul.mubr.f32.gmra.mrb[0].mxu0 %v868
          %v1259 = vpop.f32.mrb[0].mxu0
          %v1260 = vadd.f32 %v1035, %v1259
          %v1261 = vpop.f32.mrb[0].mxu0
          %1262 = vmatprep.mubr.f32.mxu0 0.0
          %1263 = vmatmul.mubr.f32.gmra.mrb[0].mxu0 %v869
          %v1264 = vpop.f32.mrb[0].mxu0
          %v1265 = vadd.f32 %v1040, %v1264
          %v1266 = vpop.f32.mrb[0].mxu0
          %1267 = vmatprep.mubr.f32.mxu0 0.0
          %1268 = vmatmul.mubr.f32.gmra.mrb[0].mxu0 %v870
          %v1269 = vpop.f32.mrb[0].mxu0
          %v1270 = vadd.f32 %v1045, %v1269
          %v1271 = vpop.f32.mrb[0].mxu0
          %1272 = vmatprep.mubr.f32.mxu0 0.0
          %1273 = vmatmul.mubr.f32.gmra.mrb[0].mxu0 %v871
          %v1274 = vpop.f32.mrb[0].mxu0
          %v1275 = vadd.f32 %v1050, %v1274
          %v1276 = vpop.f32.mrb[0].mxu0
          %1277 = vmatprep.mubr.f32.mxu0 0.0
          %1278 = vmatmul.mubr.f32.gmra.mrb[0].mxu0 %v872
          %v1279 = vpop.f32.mrb[0].mxu0
          %v1280 = vadd.f32 %v1055, %v1279
          %v1281 = vpop.f32.mrb[0].mxu0
          %1282 = vmatprep.mubr.f32.mxu0 0.0
          %1283 = vmatmul.mubr.f32.gmra.mrb[0].mxu0 %v873
          %v1284 = vpop.f32.mrb[0].mxu0
          %v1285 = vadd.f32 %v1060, %v1284
          %v1286 = vpop.f32.mrb[0].mxu0
          %1287 = vmatprep.mubr.f32.mxu0 0.0
          %1288 = vmatmul.mubr.f32.gmra.mrb[0].mxu0 %v874
          %v1289 = vpop.f32.mrb[0].mxu0
          %v1290 = vadd.f32 %v1065, %v1289
          %v1291 = vpop.f32.mrb[0].mxu0
          %1292 = vmatprep.mubr.f32.mxu0 0.0
          %1293 = vmatmul.mubr.f32.gmra.mrb[0].mxu0 %v875
          %v1294 = vpop.f32.mrb[0].mxu0
          %v1295 = vadd.f32 %v1070, %v1294
          %v1296 = vpop.f32.mrb[0].mxu0
          %1297 = vmatprep.mubr.f32.mxu0 0.0
          %1298 = vmatmul.mubr.f32.gmra.mrb[0].mxu0 %v876
          %v1299 = vpop.f32.mrb[0].mxu0
          %v1300 = vadd.f32 %v1075, %v1299
          %v1301 = vpop.f32.mrb[0].mxu0
          %1302 = vmatprep.mubr.f32.mxu0 0.0
          %1303 = vmatmul.mubr.f32.gmra.mrb[0].mxu0 %v877
          %v1304 = vpop.f32.mrb[0].mxu0
          %v1305 = vadd.f32 %v1080, %v1304
          %v1306 = vpop.f32.mrb[0].mxu0
          %1307 = vmatprep.mubr.f32.mxu0 0.0
          %1308 = vmatmul.mubr.f32.gmra.mrb[0].mxu0 %v878
          %v1309 = vpop.f32.mrb[0].mxu0
          %v1310 = vadd.f32 %v1085, %v1309
          %v1311 = vpop.f32.mrb[0].mxu0
          %1312 = vmatprep.mubr.f32.mxu0 0.0
          %1313 = vmatmul.mubr.f32.gmra.mrb[0].mxu0 %v879
          %v1314 = vpop.f32.mrb[0].mxu0
          %v1315 = vadd.f32 %v1090, %v1314
          %v1316 = vpop.f32.mrb[0].mxu0
          %1317 = vmatprep.mubr.f32.mxu0 0.0
          %1318 = vmatmul.mubr.f32.gmra.mrb[0].mxu0 %v880
          %v1319 = vpop.f32.mrb[0].mxu0
          %v1320 = vadd.f32 %v1095, %v1319
          %v1321 = vpop.f32.mrb[0].mxu0
          %1322 = vmatprep.mubr.f32.mxu0 0.0
          %1323 = vmatmul.mubr.f32.gmra.mrb[0].mxu0 %v881
          %v1324 = vpop.f32.mrb[0].mxu0
          %v1325 = vadd.f32 %v1100, %v1324
          %v1326 = vpop.f32.mrb[0].mxu0
          %1327 = vmatprep.mubr.f32.mxu0 0.0
          %1328 = vmatmul.mubr.f32.gmra.mrb[0].mxu0 %v882
          %v1329 = vpop.f32.mrb[0].mxu0
          %v1330 = vadd.f32 %v1105, %v1329
          %v1331 = vpop.f32.mrb[0].mxu0
          %1332 = vmatprep.mubr.f32.mxu0 0.0
          %1333 = vmatmul.mubr.f32.gmra.mrb[0].mxu0 %v883
          %v1334 = vpop.f32.mrb[0].mxu0
          %v1335 = vadd.f32 %v1110, %v1334
          %v1336 = vpop.f32.mrb[0].mxu0
          %1337 = vmatprep.mubr.f32.mxu0 0.0
          %1338 = vmatmul.mubr.f32.gmra.mrb[0].mxu0 %v884
          %v1339 = vpop.f32.mrb[0].mxu0
          %v1340 = vadd.f32 %v1115, %v1339
          %v1341 = vpop.f32.mrb[0].mxu0
          %1342 = vmatprep.mubr.f32.mxu0 0.0
          %1343 = vmatmul.mubr.f32.gmra.mrb[0].mxu0 %v885
          %v1344 = vpop.f32.mrb[0].mxu0
          %v1345 = vadd.f32 %v1120, %v1344
          %v1346 = vpop.f32.mrb[0].mxu0
          %1347 = vmatprep.mubr.f32.mxu0 0.0
          %1348 = vmatmul.mubr.f32.gmra.mrb[0].mxu0 %v886
          %v1349 = vpop.f32.mrb[0].mxu0
          %v1350 = vadd.f32 %v1125, %v1349
          %v1351 = vpop.f32.mrb[0].mxu0
          %1352 = vmatprep.mubr.f32.mxu0 0.0
          %1353 = vmatmul.mubr.f32.gmra.mrb[0].mxu0 %v887
          %v1354 = vpop.f32.mrb[0].mxu0
          %v1355 = vadd.f32 %v1130, %v1354
          %v1356 = vpop.f32.mrb[0].mxu0
          %1357 = vmatprep.mubr.f32.mxu0 0.0
          %1358 = vmatmul.mubr.f32.gmra.mrb[0].mxu0 %v888
          %v1359 = vpop.f32.mrb[0].mxu0
          %v1360 = vadd.f32 %v1135, %v1359
          %v1361 = vpop.f32.mrb[0].mxu0
          %1362 = vmatprep.mubr.f32.mxu0 0.0
          %1363 = vmatmul.mubr.f32.gmra.mrb[0].mxu0 %v889
          %v1364 = vpop.f32.mrb[0].mxu0
          %v1365 = vadd.f32 %v1140, %v1364
          %v1366 = vpop.f32.mrb[0].mxu0
          %1367 = vmatprep.mubr.f32.mxu0 0.0
          %1368 = vmatmul.mubr.f32.gmra.mrb[0].mxu0 %v890
          %v1369 = vpop.f32.mrb[0].mxu0
          %v1370 = vadd.f32 %v1145, %v1369
          %v1371 = vpop.f32.mrb[0].mxu0
          %1372 = vmatprep.mubr.f32.mxu0 0.0
          %1373 = vmatmul.mubr.f32.gmra.mrb[0].mxu0 %v891
          %v1374 = vpop.f32.mrb[0].mxu0
          %v1375 = vadd.f32 %v1150, %v1374
          %v1376 = vpop.f32.mrb[0].mxu0
          %1377 = vmatprep.mubr.f32.mxu0 0.0
          %1378 = vmatmul.mubr.f32.gmra.mrb[0].mxu0 %v892
          %v1379 = vpop.f32.mrb[0].mxu0
          %v1380 = vadd.f32 %v1155, %v1379
          %v1381 = vpop.f32.mrb[0].mxu0
          %1382 = vmatprep.mubr.f32.mxu0 0.0
          %1383 = vmatmul.mubr.f32.gmra.mrb[0].mxu0 %v893
          %v1384 = vpop.f32.mrb[0].mxu0
          %v1385 = vadd.f32 %v1160, %v1384
          %v1386 = vpop.f32.mrb[0].mxu0
          %1387 = vmatprep.mubr.f32.mxu0 0.0
          %1388 = vmatmul.mubr.f32.gmra.mrb[0].mxu0 %v894
          %v1389 = vpop.f32.mrb[0].mxu0
          %v1390 = vadd.f32 %v1165, %v1389
          %v1391 = vpop.f32.mrb[0].mxu0
          %1392 = vmatprep.mubr.f32.mxu0 0.0
          %1393 = vmatmul.mubr.f32.gmra.mrb[0].mxu0 %v895
          %v1394 = vpop.f32.mrb[0].mxu0
          %v1395 = vadd.f32 %v1170, %v1394
          %v1396 = vpop.f32.mrb[0].mxu0
          %1397 = vmatprep.mubr.f32.mxu0 0.0
          %1398 = vmatmul.mubr.f32.gmra.mrb[0].mxu0 %v896
          %v1399 = vpop.f32.mrb[0].mxu0
          %v1400 = vadd.f32 %v1175, %v1399
          %v1401 = vpop.f32.mrb[0].mxu0
          %1402 = vmatprep.mubr.f32.mxu0 0.0
          %1403 = vmatmul.mubr.f32.gmra.mrb[0].mxu0 %v897
          %v1404 = vpop.f32.mrb[0].mxu0
          %v1405 = vadd.f32 %v1180, %v1404
          %v1406 = vpop.f32.mrb[0].mxu0
          %1407 = vmatprep.mubr.f32.mxu0 0.0
          %1408 = vmatmul.mubr.f32.gmra.mrb[0].mxu0 %v898
          %v1409 = vpop.f32.mrb[0].mxu0
          %v1410 = vadd.f32 %v1185, %v1409
          %v1411 = vpop.f32.mrb[0].mxu0
          %1412 = vdwg.mxu0
          %v1413 = vld [vmem:[%s7] sm:$0x1]
          %v1415 = vlaneseq
          %v1416 = vshrl.u32 %v1415, 7
          %v1417 = vsub.s32 0, %v1416
          %v1418 = vrot.slane %v1413, %v1417
          %v1420 = vadd.f32 %v1255, %v1418
          %v1421 = vadd.f32 %v1260, %v1418
          %v1422 = vadd.f32 %v1265, %v1418
          %v1423 = vadd.f32 %v1270, %v1418
          %v1424 = vadd.f32 %v1275, %v1418
          %v1425 = vadd.f32 %v1280, %v1418
          %v1426 = vadd.f32 %v1285, %v1418
          %v1427 = vadd.f32 %v1290, %v1418
          %v1428 = vadd.f32 %v1295, %v1418
          %v1429 = vadd.f32 %v1300, %v1418
          %v1430 = vadd.f32 %v1305, %v1418
          %v1431 = vadd.f32 %v1310, %v1418
          %v1432 = vadd.f32 %v1315, %v1418
          %v1433 = vadd.f32 %v1320, %v1418
          %v1434 = vadd.f32 %v1325, %v1418
          %v1435 = vadd.f32 %v1330, %v1418
          %v1436 = vadd.f32 %v1335, %v1418
          %v1437 = vadd.f32 %v1340, %v1418
          %v1438 = vadd.f32 %v1345, %v1418
          %v1439 = vadd.f32 %v1350, %v1418
          %v1440 = vadd.f32 %v1355, %v1418
          %v1441 = vadd.f32 %v1360, %v1418
          %v1442 = vadd.f32 %v1365, %v1418
          %v1443 = vadd.f32 %v1370, %v1418
          %v1444 = vadd.f32 %v1375, %v1418
          %v1445 = vadd.f32 %v1380, %v1418
          %v1446 = vadd.f32 %v1385, %v1418
          %v1447 = vadd.f32 %v1390, %v1418
          %v1448 = vadd.f32 %v1395, %v1418
          %v1449 = vadd.f32 %v1400, %v1418
          %v1450 = vadd.f32 %v1405, %v1418
          %v1451 = vadd.f32 %v1410, %v1418
          %v1452 = vmul.f32 %v1420, 0.5
          %v1453 = vmul.f32 %v1421, 0.5
          %v1454 = vmul.f32 %v1422, 0.5
          %v1455 = vmul.f32 %v1423, 0.5
          %v1456 = vmul.f32 %v1424, 0.5
          %v1457 = vmul.f32 %v1425, 0.5
          %v1458 = vmul.f32 %v1426, 0.5
          %v1459 = vmul.f32 %v1427, 0.5
          %v1460 = vmul.f32 %v1428, 0.5
          %v1461 = vmul.f32 %v1429, 0.5
          %v1462 = vmul.f32 %v1430, 0.5
          %v1463 = vmul.f32 %v1431, 0.5
          %v1464 = vmul.f32 %v1432, 0.5
          %v1465 = vmul.f32 %v1433, 0.5
          %v1466 = vmul.f32 %v1434, 0.5
          %v1467 = vmul.f32 %v1435, 0.5
          %v1468 = vmul.f32 %v1436, 0.5
          %v1469 = vmul.f32 %v1437, 0.5
          %v1470 = vmul.f32 %v1438, 0.5
          %v1471 = vmul.f32 %v1439, 0.5
          %v1472 = vmul.f32 %v1440, 0.5
          %v1473 = vmul.f32 %v1441, 0.5
          %v1474 = vmul.f32 %v1442, 0.5
          %v1475 = vmul.f32 %v1443, 0.5
          %v1476 = vmul.f32 %v1444, 0.5
          %v1477 = vmul.f32 %v1445, 0.5
          %v1478 = vmul.f32 %v1446, 0.5
          %v1479 = vmul.f32 %v1447, 0.5
          %v1480 = vmul.f32 %v1448, 0.5
          %v1481 = vmul.f32 %v1449, 0.5
          %v1482 = vmul.f32 %v1450, 0.5
          %v1483 = vmul.f32 %v1451, 0.5
          %v1484 = vmul.f32 %v1420, 0.70710677
          %v1485 = vmul.f32 %v1421, 0.70710677
          %v1486 = vmul.f32 %v1422, 0.70710677
          %v1487 = vmul.f32 %v1423, 0.70710677
          %v1488 = vmul.f32 %v1424, 0.70710677
          %v1489 = vmul.f32 %v1425, 0.70710677
          %v1490 = vmul.f32 %v1426, 0.70710677
          %v1491 = vmul.f32 %v1427, 0.70710677
          %v1492 = vmul.f32 %v1428, 0.70710677
          %v1493 = vmul.f32 %v1429, 0.70710677
          %v1494 = vmul.f32 %v1430, 0.70710677
          %v1495 = vmul.f32 %v1431, 0.70710677
          %v1496 = vmul.f32 %v1432, 0.70710677
          %v1497 = vmul.f32 %v1433, 0.70710677
          %v1498 = vmul.f32 %v1434, 0.70710677
          %v1499 = vmul.f32 %v1435, 0.70710677
          %v1500 = vmul.f32 %v1436, 0.70710677
          %v1501 = vmul.f32 %v1437, 0.70710677
          %v1502 = vmul.f32 %v1438, 0.70710677
          %v1503 = vmul.f32 %v1439, 0.70710677
          %v1504 = vmul.f32 %v1440, 0.70710677
          %v1505 = vmul.f32 %v1441, 0.70710677
          %v1506 = vmul.f32 %v1442, 0.70710677
          %v1507 = vmul.f32 %v1443, 0.70710677
          %v1508 = vmul.f32 %v1444, 0.70710677
          %v1509 = vmul.f32 %v1445, 0.70710677
          %v1510 = vmul.f32 %v1446, 0.70710677
          %v1511 = vmul.f32 %v1447, 0.70710677
          %v1512 = vmul.f32 %v1448, 0.70710677
          %v1513 = vmul.f32 %v1449, 0.70710677
          %v1514 = vmul.f32 %v1450, 0.70710677
          %v1515 = vmul.f32 %v1451, 0.70710677
          %v1516 = verf.f32.pop %v1484
          %v1517 = verf.f32.pop %v1485
          %v1518 = verf.f32.pop %v1486
          %v1519 = verf.f32.pop %v1487
          %v1520 = verf.f32.pop %v1488
          %v1521 = verf.f32.pop %v1489
          %v1522 = verf.f32.pop %v1490
          %v1523 = verf.f32.pop %v1491
          %v1524 = verf.f32.pop %v1492
          %v1525 = verf.f32.pop %v1493
          %v1526 = verf.f32.pop %v1494
          %v1527 = verf.f32.pop %v1495
          %v1528 = verf.f32.pop %v1496
          %v1529 = verf.f32.pop %v1497
          %v1530 = verf.f32.pop %v1498
          %v1531 = verf.f32.pop %v1499
          %v1532 = verf.f32.pop %v1500
          %v1533 = verf.f32.pop %v1501
          %v1534 = verf.f32.pop %v1502
          %v1535 = verf.f32.pop %v1503
          %v1536 = verf.f32.pop %v1504
          %v1537 = verf.f32.pop %v1505
          %v1538 = verf.f32.pop %v1506
          %v1539 = verf.f32.pop %v1507
          %v1540 = verf.f32.pop %v1508
          %v1541 = verf.f32.pop %v1509
          %v1542 = verf.f32.pop %v1510
          %v1543 = verf.f32.pop %v1511
          %v1544 = verf.f32.pop %v1512
          %v1545 = verf.f32.pop %v1513
          %v1546 = verf.f32.pop %v1514
          %v1547 = verf.f32.pop %v1515
          %v1548 = vadd.f32 %v1516, 1.0
          %v1549 = vadd.f32 %v1517, 1.0
          %v1550 = vadd.f32 %v1518, 1.0
          %v1551 = vadd.f32 %v1519, 1.0
          %v1552 = vadd.f32 %v1520, 1.0
          %v1553 = vadd.f32 %v1521, 1.0
          %v1554 = vadd.f32 %v1522, 1.0
          %v1555 = vadd.f32 %v1523, 1.0
          %v1556 = vadd.f32 %v1524, 1.0
          %v1557 = vadd.f32 %v1525, 1.0
          %v1558 = vadd.f32 %v1526, 1.0
          %v1559 = vadd.f32 %v1527, 1.0
          %v1560 = vadd.f32 %v1528, 1.0
          %v1561 = vadd.f32 %v1529, 1.0
          %v1562 = vadd.f32 %v1530, 1.0
          %v1563 = vadd.f32 %v1531, 1.0
          %v1564 = vadd.f32 %v1532, 1.0
          %v1565 = vadd.f32 %v1533, 1.0
          %v1566 = vadd.f32 %v1534, 1.0
          %v1567 = vadd.f32 %v1535, 1.0
          %v1568 = vadd.f32 %v1536, 1.0
          %v1569 = vadd.f32 %v1537, 1.0
          %v1570 = vadd.f32 %v1538, 1.0
          %v1571 = vadd.f32 %v1539, 1.0
          %v1572 = vadd.f32 %v1540, 1.0
          %v1573 = vadd.f32 %v1541, 1.0
          %v1574 = vadd.f32 %v1542, 1.0
          %v1575 = vadd.f32 %v1543, 1.0
          %v1576 = vadd.f32 %v1544, 1.0
          %v1577 = vadd.f32 %v1545, 1.0
          %v1578 = vadd.f32 %v1546, 1.0
          %v1579 = vadd.f32 %v1547, 1.0
          %v1580 = vmul.f32 %v1452, %v1548
          %v1581 = vmul.f32 %v1453, %v1549
          %v1582 = vmul.f32 %v1454, %v1550
          %v1583 = vmul.f32 %v1455, %v1551
          %v1584 = vmul.f32 %v1456, %v1552
          %v1585 = vmul.f32 %v1457, %v1553
          %v1586 = vmul.f32 %v1458, %v1554
          %v1587 = vmul.f32 %v1459, %v1555
          %v1588 = vmul.f32 %v1460, %v1556
          %v1589 = vmul.f32 %v1461, %v1557
          %v1590 = vmul.f32 %v1462, %v1558
          %v1591 = vmul.f32 %v1463, %v1559
          %v1592 = vmul.f32 %v1464, %v1560
          %v1593 = vmul.f32 %v1465, %v1561
          %v1594 = vmul.f32 %v1466, %v1562
          %v1595 = vmul.f32 %v1467, %v1563
          %v1596 = vmul.f32 %v1468, %v1564
          %v1597 = vmul.f32 %v1469, %v1565
          %v1598 = vmul.f32 %v1470, %v1566
          %v1599 = vmul.f32 %v1471, %v1567
          %v1600 = vmul.f32 %v1472, %v1568
          %v1601 = vmul.f32 %v1473, %v1569
          %v1602 = vmul.f32 %v1474, %v1570
          %v1603 = vmul.f32 %v1475, %v1571
          %v1604 = vmul.f32 %v1476, %v1572
          %v1605 = vmul.f32 %v1477, %v1573
          %v1606 = vmul.f32 %v1478, %v1574
          %v1607 = vmul.f32 %v1479, %v1575
          %v1608 = vmul.f32 %v1480, %v1576
          %v1609 = vmul.f32 %v1481, %v1577
          %v1610 = vmul.f32 %v1482, %v1578
          %v1611 = vmul.f32 %v1483, %v1579
          %v1612 = vld [vmem:[%s8] sm:$0xff]
          %v1613 = vld [vmem:[%s8 + $0x8] sm:$0xff]
          %v1614 = vld [vmem:[%s8 + $0x10] sm:$0xff]
          %v1615 = vld [vmem:[%s8 + $0x18] sm:$0xff]
          %v1616 = vld [vmem:[%s8 + $0x20] sm:$0xff]
          %v1617 = vld [vmem:[%s8 + $0x28] sm:$0xff]
          %v1618 = vld [vmem:[%s8 + $0x30] sm:$0xff]
          %v1619 = vld [vmem:[%s8 + $0x38] sm:$0xff]
          %v1620 = vld [vmem:[%s8 + $0x40] sm:$0xff]
          %v1621 = vld [vmem:[%s8 + $0x48] sm:$0xff]
          %v1622 = vld [vmem:[%s8 + $0x50] sm:$0xff]
          %v1623 = vld [vmem:[%s8 + $0x58] sm:$0xff]
          %v1624 = vld [vmem:[%s8 + $0x60] sm:$0xff]
          %v1625 = vld [vmem:[%s8 + $0x68] sm:$0xff]
          %v1626 = vld [vmem:[%s8 + $0x70] sm:$0xff]
          %v1627 = vld [vmem:[%s8 + $0x78] sm:$0xff]
          %v1628 = vld [vmem:[%s9] sm:$0x1]
          %v1630 = vlaneseq
          %v1631 = vshrl.u32 %v1630, 7
          %v1632 = vsub.s32 0, %v1631
          %v1633 = vrot.slane %v1628, %v1632
          %1635 = vmatprep.subr.mxu0 0.0
          %1636 = vmatpush1.msra.mxu0 %v1612
          %1637 = vmatprep.subr.mxu0 0.0
          %1638 = vmatpush1.msra.mxu0 %v1613
          %1639 = vmatprep.subr.mxu0 0.0
          %1640 = vmatpush1.msra.mxu0 %v1614
          %1641 = vmatprep.subr.mxu0 0.0
          %1642 = vmatpush1.msra.mxu0 %v1615
          %1643 = vmatprep.subr.mxu0 0.0
          %1644 = vmatpush1.msra.mxu0 %v1616
          %1645 = vmatprep.subr.mxu0 0.0
          %1646 = vmatpush1.msra.mxu0 %v1617
          %1647 = vmatprep.subr.mxu0 0.0
          %1648 = vmatpush1.msra.mxu0 %v1618
          %1649 = vmatprep.subr.mxu0 0.0
          %1650 = vmatpush1.msra.mxu0 %v1619
          %1651 = vmatprep.subr.mxu0 0.0
          %1652 = vmatpush1.msra.mxu0 %v1620
          %1653 = vmatprep.subr.mxu0 0.0
          %1654 = vmatpush1.msra.mxu0 %v1621
          %1655 = vmatprep.subr.mxu0 0.0
          %1656 = vmatpush1.msra.mxu0 %v1622
          %1657 = vmatprep.subr.mxu0 0.0
          %1658 = vmatpush1.msra.mxu0 %v1623
          %1659 = vmatprep.subr.mxu0 0.0
          %1660 = vmatpush1.msra.mxu0 %v1624
          %1661 = vmatprep.subr.mxu0 0.0
          %1662 = vmatpush1.msra.mxu0 %v1625
          %1663 = vmatprep.subr.mxu0 0.0
          %1664 = vmatpush1.msra.mxu0 %v1626
          %1665 = vmatprep.subr.mxu0 0.0
          %1666 = vmatpush1.msra.mxu0 %v1627
          %1667 = vmatprep.subr.mxu0 0.0
          %1668 = vmatpush1.msra.mxu0 0.0
          %1669 = vmatprep.subr.mxu0 0.0
          %1670 = vmatpush1.msra.mxu0 0.0
          %1671 = vmatprep.subr.mxu0 0.0
          %1672 = vmatpush1.msra.mxu0 0.0
          %1673 = vmatprep.subr.mxu0 0.0
          %1674 = vmatpush1.msra.mxu0 0.0
          %1675 = vmatprep.subr.mxu0 0.0
          %1676 = vmatpush1.msra.mxu0 0.0
          %1677 = vmatprep.subr.mxu0 0.0
          %1678 = vmatpush1.msra.mxu0 0.0
          %1679 = vmatprep.subr.mxu0 0.0
          %1680 = vmatpush1.msra.mxu0 0.0
          %1681 = vmatprep.subr.mxu0 0.0
          %1682 = vmatpush1.msra.mxu0 0.0
          %1683 = vmatprep.subr.mxu0 0.0
          %1684 = vmatpush1.msra.mxu0 0.0
          %1685 = vmatprep.subr.mxu0 0.0
          %1686 = vmatpush1.msra.mxu0 0.0
          %1687 = vmatprep.subr.mxu0 0.0
          %1688 = vmatpush1.msra.mxu0 0.0
          %1689 = vmatprep.subr.mxu0 0.0
          %1690 = vmatpush1.msra.mxu0 0.0
          %1691 = vmatprep.subr.mxu0 0.0
          %1692 = vmatpush1.msra.mxu0 0.0
          %1693 = vmatprep.subr.mxu0 0.0
          %1694 = vmatpush1.msra.mxu0 0.0
          %1695 = vmatprep.subr.mxu0 0.0
          %1696 = vmatpush1.msra.mxu0 0.0
          %1697 = vmatprep.subr.mxu0 0.0
          %1698 = vmatpush1.msra.mxu0 0.0
          %1699 = vmatprep.mubr.f32.mxu0 0.0
          %1700 = vmatmul.mubr.f32.gmra.mrb[0].mxu0 %v1580
          %v1701 = vpop.f32.mrb[0].mxu0
          %v1702 = vadd.f32 %v1633, %v1701
          %v1703 = vpop.f32.mrb[0].mxu0
          %1704 = vmatprep.mubr.f32.mxu0 0.0
          %1705 = vmatmul.mubr.f32.gmra.mrb[0].mxu0 %v1581
          %v1706 = vpop.f32.mrb[0].mxu0
          %v1707 = vadd.f32 %v1633, %v1706
          %v1708 = vpop.f32.mrb[0].mxu0
          %1709 = vmatprep.mubr.f32.mxu0 0.0
          %1710 = vmatmul.mubr.f32.gmra.mrb[0].mxu0 %v1582
          %v1711 = vpop.f32.mrb[0].mxu0
          %v1712 = vadd.f32 %v1633, %v1711
          %v1713 = vpop.f32.mrb[0].mxu0
          %1714 = vmatprep.mubr.f32.mxu0 0.0
          %1715 = vmatmul.mubr.f32.gmra.mrb[0].mxu0 %v1583
          %v1716 = vpop.f32.mrb[0].mxu0
          %v1717 = vadd.f32 %v1633, %v1716
          %v1718 = vpop.f32.mrb[0].mxu0
          %1719 = vmatprep.mubr.f32.mxu0 0.0
          %1720 = vmatmul.mubr.f32.gmra.mrb[0].mxu0 %v1584
          %v1721 = vpop.f32.mrb[0].mxu0
          %v1722 = vadd.f32 %v1633, %v1721
          %v1723 = vpop.f32.mrb[0].mxu0
          %1724 = vmatprep.mubr.f32.mxu0 0.0
          %1725 = vmatmul.mubr.f32.gmra.mrb[0].mxu0 %v1585
          %v1726 = vpop.f32.mrb[0].mxu0
          %v1727 = vadd.f32 %v1633, %v1726
          %v1728 = vpop.f32.mrb[0].mxu0
          %1729 = vmatprep.mubr.f32.mxu0 0.0
          %1730 = vmatmul.mubr.f32.gmra.mrb[0].mxu0 %v1586
          %v1731 = vpop.f32.mrb[0].mxu0
          %v1732 = vadd.f32 %v1633, %v1731
          %v1733 = vpop.f32.mrb[0].mxu0
          %1734 = vmatprep.mubr.f32.mxu0 0.0
          %1735 = vmatmul.mubr.f32.gmra.mrb[0].mxu0 %v1587
          %v1736 = vpop.f32.mrb[0].mxu0
          %v1737 = vadd.f32 %v1633, %v1736
          %v1738 = vpop.f32.mrb[0].mxu0
          %1739 = vmatprep.mubr.f32.mxu0 0.0
          %1740 = vmatmul.mubr.f32.gmra.mrb[0].mxu0 %v1588
          %v1741 = vpop.f32.mrb[0].mxu0
          %v1742 = vadd.f32 %v1633, %v1741
          %v1743 = vpop.f32.mrb[0].mxu0
          %1744 = vmatprep.mubr.f32.mxu0 0.0
          %1745 = vmatmul.mubr.f32.gmra.mrb[0].mxu0 %v1589
          %v1746 = vpop.f32.mrb[0].mxu0
          %v1747 = vadd.f32 %v1633, %v1746
          %v1748 = vpop.f32.mrb[0].mxu0
          %1749 = vmatprep.mubr.f32.mxu0 0.0
          %1750 = vmatmul.mubr.f32.gmra.mrb[0].mxu0 %v1590
          %v1751 = vpop.f32.mrb[0].mxu0
          %v1752 = vadd.f32 %v1633, %v1751
          %v1753 = vpop.f32.mrb[0].mxu0
          %1754 = vmatprep.mubr.f32.mxu0 0.0
          %1755 = vmatmul.mubr.f32.gmra.mrb[0].mxu0 %v1591
          %v1756 = vpop.f32.mrb[0].mxu0
          %v1757 = vadd.f32 %v1633, %v1756
          %v1758 = vpop.f32.mrb[0].mxu0
          %1759 = vmatprep.mubr.f32.mxu0 0.0
          %1760 = vmatmul.mubr.f32.gmra.mrb[0].mxu0 %v1592
          %v1761 = vpop.f32.mrb[0].mxu0
          %v1762 = vadd.f32 %v1633, %v1761
          %v1763 = vpop.f32.mrb[0].mxu0
          %1764 = vmatprep.mubr.f32.mxu0 0.0
          %1765 = vmatmul.mubr.f32.gmra.mrb[0].mxu0 %v1593
          %v1766 = vpop.f32.mrb[0].mxu0
          %v1767 = vadd.f32 %v1633, %v1766
          %v1768 = vpop.f32.mrb[0].mxu0
          %1769 = vmatprep.mubr.f32.mxu0 0.0
          %1770 = vmatmul.mubr.f32.gmra.mrb[0].mxu0 %v1594
          %v1771 = vpop.f32.mrb[0].mxu0
          %v1772 = vadd.f32 %v1633, %v1771
          %v1773 = vpop.f32.mrb[0].mxu0
          %1774 = vmatprep.mubr.f32.mxu0 0.0
          %1775 = vmatmul.mubr.f32.gmra.mrb[0].mxu0 %v1595
          %v1776 = vpop.f32.mrb[0].mxu0
          %v1777 = vadd.f32 %v1633, %v1776
          %v1778 = vpop.f32.mrb[0].mxu0
          %1779 = vmatprep.mubr.f32.mxu0 0.0
          %1780 = vmatmul.mubr.f32.gmra.mrb[0].mxu0 %v1596
          %v1781 = vpop.f32.mrb[0].mxu0
          %v1782 = vadd.f32 %v1633, %v1781
          %v1783 = vpop.f32.mrb[0].mxu0
          %1784 = vmatprep.mubr.f32.mxu0 0.0
          %1785 = vmatmul.mubr.f32.gmra.mrb[0].mxu0 %v1597
          %v1786 = vpop.f32.mrb[0].mxu0
          %v1787 = vadd.f32 %v1633, %v1786
          %v1788 = vpop.f32.mrb[0].mxu0
          %1789 = vmatprep.mubr.f32.mxu0 0.0
          %1790 = vmatmul.mubr.f32.gmra.mrb[0].mxu0 %v1598
          %v1791 = vpop.f32.mrb[0].mxu0
          %v1792 = vadd.f32 %v1633, %v1791
          %v1793 = vpop.f32.mrb[0].mxu0
          %1794 = vmatprep.mubr.f32.mxu0 0.0
          %1795 = vmatmul.mubr.f32.gmra.mrb[0].mxu0 %v1599
          %v1796 = vpop.f32.mrb[0].mxu0
          %v1797 = vadd.f32 %v1633, %v1796
          %v1798 = vpop.f32.mrb[0].mxu0
          %1799 = vmatprep.mubr.f32.mxu0 0.0
          %1800 = vmatmul.mubr.f32.gmra.mrb[0].mxu0 %v1600
          %v1801 = vpop.f32.mrb[0].mxu0
          %v1802 = vadd.f32 %v1633, %v1801
          %v1803 = vpop.f32.mrb[0].mxu0
          %1804 = vmatprep.mubr.f32.mxu0 0.0
          %1805 = vmatmul.mubr.f32.gmra.mrb[0].mxu0 %v1601
          %v1806 = vpop.f32.mrb[0].mxu0
          %v1807 = vadd.f32 %v1633, %v1806
          %v1808 = vpop.f32.mrb[0].mxu0
          %1809 = vmatprep.mubr.f32.mxu0 0.0
          %1810 = vmatmul.mubr.f32.gmra.mrb[0].mxu0 %v1602
          %v1811 = vpop.f32.mrb[0].mxu0
          %v1812 = vadd.f32 %v1633, %v1811
          %v1813 = vpop.f32.mrb[0].mxu0
          %1814 = vmatprep.mubr.f32.mxu0 0.0
          %1815 = vmatmul.mubr.f32.gmra.mrb[0].mxu0 %v1603
          %v1816 = vpop.f32.mrb[0].mxu0
          %v1817 = vadd.f32 %v1633, %v1816
          %v1818 = vpop.f32.mrb[0].mxu0
          %1819 = vmatprep.mubr.f32.mxu0 0.0
          %1820 = vmatmul.mubr.f32.gmra.mrb[0].mxu0 %v1604
          %v1821 = vpop.f32.mrb[0].mxu0
          %v1822 = vadd.f32 %v1633, %v1821
          %v1823 = vpop.f32.mrb[0].mxu0
          %1824 = vmatprep.mubr.f32.mxu0 0.0
          %1825 = vmatmul.mubr.f32.gmra.mrb[0].mxu0 %v1605
          %v1826 = vpop.f32.mrb[0].mxu0
          %v1827 = vadd.f32 %v1633, %v1826
          %v1828 = vpop.f32.mrb[0].mxu0
          %1829 = vmatprep.mubr.f32.mxu0 0.0
          %1830 = vmatmul.mubr.f32.gmra.mrb[0].mxu0 %v1606
          %v1831 = vpop.f32.mrb[0].mxu0
          %v1832 = vadd.f32 %v1633, %v1831
          %v1833 = vpop.f32.mrb[0].mxu0
          %1834 = vmatprep.mubr.f32.mxu0 0.0
          %1835 = vmatmul.mubr.f32.gmra.mrb[0].mxu0 %v1607
          %v1836 = vpop.f32.mrb[0].mxu0
          %v1837 = vadd.f32 %v1633, %v1836
          %v1838 = vpop.f32.mrb[0].mxu0
          %1839 = vmatprep.mubr.f32.mxu0 0.0
          %1840 = vmatmul.mubr.f32.gmra.mrb[0].mxu0 %v1608
          %v1841 = vpop.f32.mrb[0].mxu0
          %v1842 = vadd.f32 %v1633, %v1841
          %v1843 = vpop.f32.mrb[0].mxu0
          %1844 = vmatprep.mubr.f32.mxu0 0.0
          %1845 = vmatmul.mubr.f32.gmra.mrb[0].mxu0 %v1609
          %v1846 = vpop.f32.mrb[0].mxu0
          %v1847 = vadd.f32 %v1633, %v1846
          %v1848 = vpop.f32.mrb[0].mxu0
          %1849 = vmatprep.mubr.f32.mxu0 0.0
          %1850 = vmatmul.mubr.f32.gmra.mrb[0].mxu0 %v1610
          %v1851 = vpop.f32.mrb[0].mxu0
          %v1852 = vadd.f32 %v1633, %v1851
          %v1853 = vpop.f32.mrb[0].mxu0
          %1854 = vmatprep.mubr.f32.mxu0 0.0
          %1855 = vmatmul.mubr.f32.gmra.mrb[0].mxu0 %v1611
          %v1856 = vpop.f32.mrb[0].mxu0
          %v1857 = vadd.f32 %v1633, %v1856
          %v1858 = vpop.f32.mrb[0].mxu0
          %1859 = vdwg.mxu0
          %1860 = vst [vmem:[%s474] sm:$0xff] %v1702
          %1861 = vst [vmem:[%s474 + $0x8] sm:$0xff] %v1707
          %1862 = vst [vmem:[%s474 + $0x10] sm:$0xff] %v1712
          %1863 = vst [vmem:[%s474 + $0x18] sm:$0xff] %v1717
          %1864 = vst [vmem:[%s474 + $0x20] sm:$0xff] %v1722
          %1865 = vst [vmem:[%s474 + $0x28] sm:$0xff] %v1727
          %1866 = vst [vmem:[%s474 + $0x30] sm:$0xff] %v1732
          %1867 = vst [vmem:[%s474 + $0x38] sm:$0xff] %v1737
          %1868 = vst [vmem:[%s474 + $0x40] sm:$0xff] %v1742
          %1869 = vst [vmem:[%s474 + $0x48] sm:$0xff] %v1747
          %1870 = vst [vmem:[%s474 + $0x50] sm:$0xff] %v1752
          %1871 = vst [vmem:[%s474 + $0x58] sm:$0xff] %v1757
          %1872 = vst [vmem:[%s474 + $0x60] sm:$0xff] %v1762
          %1873 = vst [vmem:[%s474 + $0x68] sm:$0xff] %v1767
          %1874 = vst [vmem:[%s474 + $0x70] sm:$0xff] %v1772
          %1875 = vst [vmem:[%s474 + $0x78] sm:$0xff] %v1777
          %1876 = vst [vmem:[%s474 + $0x80] sm:$0xff] %v1782
          %1877 = vst [vmem:[%s474 + $0x88] sm:$0xff] %v1787
          %1878 = vst [vmem:[%s474 + $0x90] sm:$0xff] %v1792
          %1879 = vst [vmem:[%s474 + $0x98] sm:$0xff] %v1797
          %1880 = vst [vmem:[%s474 + $0xa0] sm:$0xff] %v1802
          %1881 = vst [vmem:[%s474 + $0xa8] sm:$0xff] %v1807
          %1882 = vst [vmem:[%s474 + $0xb0] sm:$0xff] %v1812
          %1883 = vst [vmem:[%s474 + $0xb8] sm:$0xff] %v1817
          %1884 = vst [vmem:[%s474 + $0xc0] sm:$0xff] %v1822
          %1885 = vst [vmem:[%s474 + $0xc8] sm:$0xff] %v1827
          %1886 = vst [vmem:[%s474 + $0xd0] sm:$0xff] %v1832
          %1887 = vst [vmem:[%s474 + $0xd8] sm:$0xff] %v1837
          %1888 = vst [vmem:[%s474 + $0xe0] sm:$0xff] %v1842
          %1889 = vst [vmem:[%s474 + $0xe8] sm:$0xff] %v1847
          %1890 = vst [vmem:[%s474 + $0xf0] sm:$0xff] %v1852
          %1891 = vst [vmem:[%s474 + $0xf8] sm:$0xff] %v1857
        $region102: #{_sum_gnn_forward.1} parent=85 // pred_fallthru
          _
        %s1892 = smul.u32 32, %s35
        %p1893 = scmp.lt.s32.totalorder %s1892, 63
        %s1894 = scalar_select %p1893, %s1892, 63
        %s1895 = smul.addr %s1894, 8
        %s1896 = scalar_lea.vmem %s10, %s1895
        // Predicated region
        $region103: #{_sum_gnn_forward.1} parent=85 // pred_check
          %p1897 = pneg %p258
        $region104: #{_sum_gnn_forward.1} parent=85 // pred_check_branch
          %1899 = sbr.rel (%p1897) target = $region106
        $region105: #{_sum_gnn_forward.1} parent=85 // pred_region
          %s1900 = smul.u32 32, %s35
        $region106: #{_sum_gnn_forward.1} parent=85 // pred_fallthru
          _
      $region86: #{_sum_gnn_forward.1} parent=5 // pred_fallthru
        _
      %p1901 = scmp.le.s32.totalorder 2, %s26
      // Predicated region
      $region107: #{_sum_gnn_forward.1} parent=5 // pred_check
        %p1902 = pneg %p1901
      $region108: #{_sum_gnn_forward.1} parent=5 // pred_check_branch
        %1904 = sbr.rel (%p1902) target = $region110
      $region109: #{_sum_gnn_forward.1} parent=5 // pred_region
        %s1905 = ssub.s32 %s26, 2
        // Predicated region
        $region111: #{_sum_gnn_forward.1} parent=109 // pred_check
          %p1906 = pneg %p264
        $region112: #{_sum_gnn_forward.1} parent=109 // pred_check_branch
          %1908 = sbr.rel (%p1906) target = $region114
        $region113: #{_sum_gnn_forward.1} parent=109 // pred_region
          %s1909 = smul.u32 32, %s37
          %p1910 = scmp.lt.s32.totalorder %s1909, 63
          %s1911 = scalar_select %p1910, %s1909, 63
          %s1912 = smul.addr %s1911, 8
          %s1913 = scalar_lea.vmem %s10, %s1912
        $region114: #{_sum_gnn_forward.1} parent=109 // pred_fallthru
          _
      $region110: #{_sum_gnn_forward.1} parent=5 // pred_fallthru
        _
    $region6: #{_sum_gnn_forward.1} parent=1 // loop_footer
      %s30 = sadd.s32 1, %s26
    $region7: #{_sum_gnn_forward.1} parent=1 // loop_footer_branch
      %25 = sbr.rel target = $region3
    $region8: #{_sum_gnn_forward.1} parent=1 // loop_exit
      _

</llo_original>
